<compile_context>
chip_gen: v5e
topology: v5e:2x2
jax: 0.10.0
libtpu: 0.0.40
codegen_flags: <defaults>
</compile_context>

<pallas_src>
import functools

import jax
import jax.numpy as jnp
import numpy as np
from jax.experimental import pallas as pl
from jax.experimental.pallas import tpu as pltpu

D_IN, D_H1, D_H2, D_OUT = 768, 512, 128, 1
D_OUT_PAD = 128  # lane-dense padded output width


def _octswap_kernel(x_ref, w1_ref, b1_ref, w2_ref, b2_ref, w3_ref, b3_ref,
                    o_ref, xmax_ref, *, n_total, tile_n):
    """One (batch-tile, N-tile) grid step.

    x_ref    : (TB, TN, 768) streamed input block (native dtype, bf16 or f32).
    xmax_ref : (TB, 768) running max over the N axis (VMEM scratch).
    o_ref    : (TB, 128) lane-dense padded output (written on the last N step).
    """
    n = pl.program_id(1)

    x = x_ref[...]
    if n_total % tile_n != 0:
        # Partial tail block along N: neutralize out-of-range rows before max.
        idx = jax.lax.broadcasted_iota(jnp.int32, (1, tile_n, D_IN), 1)
        valid = (n * tile_n + idx) < n_total
        x = jnp.where(valid, x, jnp.array(-jnp.inf, dtype=x.dtype))

    # topk(k=1, dim=1).values == max over axis 1 (XLU sublane reduce, no cast).
    xm = jnp.max(x, axis=1)                                        # (TB, 768)

    @pl.when(n == 0)
    def _init():
        xmax_ref[...] = jnp.full_like(xmax_ref, -jnp.inf)

    xmax_ref[...] = jnp.maximum(xmax_ref[...], xm)

    @pl.when(n == pl.num_programs(1) - 1)
    def _finalize():
        # bf16 MXU operands, f32 accumulation (astype is a no-op for bf16 input).
        xb = xmax_ref[...].astype(jnp.bfloat16)
        h1 = jnp.dot(xb, w1_ref[...],
                     preferred_element_type=jnp.float32) + b1_ref[...]
        h1 = jnp.maximum(h1, 0.0)                                  # (TB, 512)
        h2 = jnp.dot(h1.astype(jnp.bfloat16), w2_ref[...],
                     preferred_element_type=jnp.float32) + b2_ref[...]
        h2 = jnp.maximum(h2, 0.0)                                  # (TB, 128)
        out = jnp.dot(h2.astype(jnp.bfloat16), w3_ref[...],
                      preferred_element_type=jnp.float32) + b3_ref[...]
        o_ref[...] = out.astype(o_ref.dtype)                       # (TB, 128)


def _round_up(x, m):
    return ((x + m - 1) // m) * m


def _device_generation():
    try:
        kind = jax.devices()[0].device_kind.lower()
    except Exception:
        return "unknown"
    if "v5 lite" in kind or "v5e" in kind or "v5litepod" in kind:
        return "v5e"
    if "v6" in kind:
        return "v6e"
    if "v7" in kind or "7x" in kind:
        return "v7x"
    return "unknown"


def _select_tiles(B, N, in_itemsize, gen):
    tb_cap = {"v6e": 512, "v5e": 256, "v7x": 256}.get(gen, 256)
    if gen == "v7x":
        # Guarantee >= 2 batch grid steps so both TensorCores get work.
        tile_b = min(tb_cap, max(8, _round_up(pl.cdiv(B, 2), 8)))
    else:
        tile_b = min(tb_cap, max(8, _round_up(B, 8)))
    # Input double-buffer budget drives the N tile (footprint independent of N;
    # v7x has only 64 MiB of VMEM, v5e/v6e have 128 MiB).
    budget = {"v6e": 48, "v5e": 32, "v7x": 20}.get(gen, 20) * 1024 * 1024
    tn = budget // (2 * tile_b * D_IN * in_itemsize)
    tn = max(8, (tn // 8) * 8)
    tile_n = int(min(N, tn))
    if tile_n < N:
        tile_n = max(8, (tile_n // 8) * 8)   # (8,128) rule on the sublane dim
    return tile_b, tile_n


def octswap_forward(batch_oct, params, *, tile_b=None, tile_n=None):
    """batch_oct: (B, N, 768), f32 or bf16 (bf16 halves the dominant HBM read).
    params: weights stored (in_features, out_features)."""
    B, N, D = batch_oct.shape
    assert D == D_IN, f"feature dim must be {D_IN}, got {D}"

    gen = _device_generation()
    in_itemsize = jnp.dtype(batch_oct.dtype).itemsize
    auto_tb, auto_tn = _select_tiles(B, N, in_itemsize, gen)
    if tile_b is None:
        tile_b = auto_tb
    if tile_n is None:
        tile_n = auto_tn
    assert tile_b % 8 == 0
    assert tile_n == N or tile_n % 8 == 0

    # Resident weights in bf16 (MXU-native, halves resident VMEM), biases f32.
    w1 = params["w1"].astype(jnp.bfloat16)
    w2 = params["w2"].astype(jnp.bfloat16)
    w3p = jnp.pad(params["w3"].astype(jnp.bfloat16),
                  ((0, 0), (0, D_OUT_PAD - D_OUT)))                 # (128, 128)
    b1 = params["b1"].astype(jnp.float32)
    b2 = params["b2"].astype(jnp.float32)
    b3p = jnp.pad(params["b3"].astype(jnp.float32),
                  ((0, 0), (0, D_OUT_PAD - D_OUT)))                 # (1, 128)

    grid = (pl.cdiv(B, tile_b), pl.cdiv(N, tile_n))
    const = lambda i, n: (0, 0)

    in_specs = [
        pl.BlockSpec((tile_b, tile_n, D_IN), lambda i, n: (i, n, 0)),  # streamed
        pl.BlockSpec((D_IN, D_H1), const),                             # resident
        pl.BlockSpec((1, D_H1), const),
        pl.BlockSpec((D_H1, D_H2), const),
        pl.BlockSpec((1, D_H2), const),
        pl.BlockSpec((D_H2, D_OUT_PAD), const),
        pl.BlockSpec((1, D_OUT_PAD), const),
    ]
    out_specs = pl.BlockSpec((tile_b, D_OUT_PAD), lambda i, n: (i, 0))

    flops = 2 * B * (D_IN * D_H1 + D_H1 * D_H2 + D_H2 * D_OUT_PAD)
    bytes_accessed = (B * N * D_IN * in_itemsize                         # input
                      + (D_IN * D_H1 + D_H1 * D_H2 + D_H2 * D_OUT_PAD) * 2  # w
                      + (D_H1 + D_H2 + D_OUT_PAD) * 4                    # biases
                      + B * D_OUT_PAD * 2)                               # output

    vmem_limit = (96 if gen == "v6e" else 48) * 1024 * 1024

    kernel = functools.partial(_octswap_kernel, n_total=N, tile_n=tile_n)

    out_padded = pl.pallas_call(
        kernel,
        out_shape=jax.ShapeDtypeStruct((B, D_OUT_PAD), jnp.bfloat16),
        grid=grid,
        in_specs=in_specs,
        out_specs=out_specs,
        scratch_shapes=[pltpu.VMEM((tile_b, D_IN), batch_oct.dtype)],
        compiler_params=pltpu.CompilerParams(
            dimension_semantics=("parallel", "arbitrary"),
            vmem_limit_bytes=vmem_limit,
        ),
        cost_estimate=pl.CostEstimate(
            flops=flops, transcendentals=0, bytes_accessed=bytes_accessed),
    )(batch_oct, w1, b1, w2, b2, w3p, b3p)

    # NOTE: fold this column slice into the consumer where possible (it re-reads
    # the padded buffer); kept here so the wrapper matches the nn.Module contract.
    return out_padded[:, :D_OUT]


def init_params(key):
    """Deterministic init mimicking nn.Linear's U(-1/sqrt(fan_in), 1/sqrt(fan_in)).
    Weights are stored as (in_features, out_features) — transpose when importing
    real PyTorch checkpoints (nn.Linear stores (out, in))."""
    ks = jax.random.split(key, 6)

    def lin(kw, kb, fan_in, fan_out):
        bound = 1.0 / np.sqrt(fan_in)
        w = jax.random.uniform(kw, (fan_in, fan_out), jnp.float32, -bound, bound)
        b = jax.random.uniform(kb, (1, fan_out), jnp.float32, -bound, bound)
        return w, b

    w1, b1 = lin(ks[0], ks[1], D_IN, D_H1)
    w2, b2 = lin(ks[2], ks[3], D_H1, D_H2)
    w3, b3 = lin(ks[4], ks[5], D_H2, D_OUT)
    return {"w1": w1, "b1": b1, "w2": w2, "b2": b2, "w3": w3, "b3": b3}


def reference_forward(batch_oct, params):
    xm = jnp.max(batch_oct, axis=1)
    h1 = jnp.maximum(xm @ params["w1"] + params["b1"], 0.0)
    h2 = jnp.maximum(h1 @ params["w2"] + params["b2"], 0.0)
    return h2 @ params["w3"] + params["b3"]


if __name__ == "__main__":
    key = jax.random.PRNGKey(0)
    k_x, k_p = jax.random.split(key)
    params = init_params(k_p)

    # Case 1: small shapes, bf16 input produced at the source (no wrapper cast).
    B, N = 2, 8
    batch_oct = jax.random.normal(k_x, (B, N, D_IN), jnp.bfloat16)
    out = jax.block_until_ready(octswap_forward(batch_oct, params))
    ref = jax.block_until_ready(
        reference_forward(batch_oct.astype(jnp.float32), params))
    assert out.shape == (B, D_OUT)
    # bf16 MXU operands / bf16 output vs f32 reference -> loosened tolerance.
    np.testing.assert_allclose(np.asarray(out.astype(jnp.float32)),
                               np.asarray(ref), rtol=2e-2, atol=2e-2)

    # Case 2: f32 input with partial tail blocks on BOTH grid axes
    # (B % tile_b != 0 and N % tile_n != 0) to exercise masking paths.
    B2, N2 = 20, 12
    x2 = jax.random.normal(jax.random.PRNGKey(1), (B2, N2, D_IN), jnp.float32)
    out2 = jax.block_until_ready(octswap_forward(x2, params, tile_b=16, tile_n=8))
    ref2 = jax.block_until_ready(reference_forward(x2, params))
    assert out2.shape == (B2, D_OUT)
    np.testing.assert_allclose(np.asarray(out2.astype(jnp.float32)),
                               np.asarray(ref2), rtol=2e-2, atol=2e-2)

    print("KERNEL_OK")
</pallas_src>

<mosaic_0001>
module attributes {stable_mosaic.version = 11 : i64} {
  func.func @_octswap_kernel(%arg0: i32, %arg1: i32, %arg2: memref<8x8x768xbf16, #tpu.memory_space<vmem>>, %arg3: memref<768x512xbf16, #tpu.memory_space<vmem>>, %arg4: memref<1x512xf32, #tpu.memory_space<vmem>>, %arg5: memref<512x128xbf16, #tpu.memory_space<vmem>>, %arg6: memref<1x128xf32, #tpu.memory_space<vmem>>, %arg7: memref<128x128xbf16, #tpu.memory_space<vmem>>, %arg8: memref<1x128xf32, #tpu.memory_space<vmem>>, %arg9: memref<8x128xbf16, #tpu.memory_space<vmem>>, %arg10: memref<8x768xbf16, #tpu.memory_space<vmem>>) attributes {dimension_semantics = [#tpu.dimension_semantics<parallel>, #tpu.dimension_semantics<arbitrary>], iteration_bounds = array<i64: 1, 1>, scalar_prefetch = 0 : i64, scratch_operands = 1 : i64, tpu.core_type = #tpu.core_type<tc>, window_params = [{transform_indices = @transform_0, window_bounds = array<i64: 8, 8, 768>}, {pipeline_mode = #tpu.pipeline_mode<synchronous>, transform_indices = @transform_1, window_bounds = array<i64: 768, 512>}, {pipeline_mode = #tpu.pipeline_mode<synchronous>, transform_indices = @transform_2, window_bounds = array<i64: 1, 512>}, {pipeline_mode = #tpu.pipeline_mode<synchronous>, transform_indices = @transform_3, window_bounds = array<i64: 512, 128>}, {pipeline_mode = #tpu.pipeline_mode<synchronous>, transform_indices = @transform_4, window_bounds = array<i64: 1, 128>}, {pipeline_mode = #tpu.pipeline_mode<synchronous>, transform_indices = @transform_5, window_bounds = array<i64: 128, 128>}, {pipeline_mode = #tpu.pipeline_mode<synchronous>, transform_indices = @transform_6, window_bounds = array<i64: 1, 128>}, {transform_indices = @transform_7, window_bounds = array<i64: 8, 128>}]} {
    %c0 = arith.constant 0 : index
    %c0_0 = arith.constant 0 : index
    %c0_1 = arith.constant 0 : index
    %0 = vector.load %arg2[%c0, %c0_0, %c0_1] : memref<8x8x768xbf16, #tpu.memory_space<vmem>>, vector<8x8x768xbf16>
    %cst = arith.constant dense<0xFF80> : vector<8x768xbf16>
    %1 = vector.multi_reduction <maximumf>, %0, %cst [1] : vector<8x8x768xbf16> to vector<8x768xbf16>
    %c0_i32 = arith.constant 0 : i32
    %2 = arith.cmpi eq, %arg1, %c0_i32 : i32
    %3 = arith.extui %2 : i1 to i32
    %c0_i32_2 = arith.constant 0 : i32
    %4 = arith.cmpi ne, %3, %c0_i32_2 : i32
    scf.if %4 {
      %cst_9 = arith.constant 0xFF80 : bf16
      %11 = vector.broadcast %cst_9 : bf16 to vector<8x768xbf16>
      %c0_10 = arith.constant 0 : index
      %c0_11 = arith.constant 0 : index
      %12 = vector.load %arg10[%c0_10, %c0_11] : memref<8x768xbf16, #tpu.memory_space<vmem>>, vector<8x768xbf16>
      tpu.vector_store %arg10[%c0_10, %c0_11], %11 {strides = array<i32>} : memref<8x768xbf16, #tpu.memory_space<vmem>>, vector<8x768xbf16>,
    } else {
    }
    %c0_3 = arith.constant 0 : index
    %c0_4 = arith.constant 0 : index
    %5 = vector.load %arg10[%c0_3, %c0_4] : memref<8x768xbf16, #tpu.memory_space<vmem>>, vector<8x768xbf16>
    %6 = arith.maximumf %5, %1 : vector<8x768xbf16>
    %c0_5 = arith.constant 0 : index
    %c0_6 = arith.constant 0 : index
    %7 = vector.load %arg10[%c0_5, %c0_6] : memref<8x768xbf16, #tpu.memory_space<vmem>>, vector<8x768xbf16>
    tpu.vector_store %arg10[%c0_5, %c0_6], %6 {strides = array<i32>} : memref<8x768xbf16, #tpu.memory_space<vmem>>, vector<8x768xbf16>,
    %c0_i32_7 = arith.constant 0 : i32
    %8 = arith.cmpi eq, %arg1, %c0_i32_7 : i32
    %9 = arith.extui %8 : i1 to i32
    %c0_i32_8 = arith.constant 0 : i32
    %10 = arith.cmpi ne, %9, %c0_i32_8 : i32
    scf.if %10 {
      %c0_9 = arith.constant 0 : index
      %c0_10 = arith.constant 0 : index
      %11 = vector.load %arg10[%c0_9, %c0_10] : memref<8x768xbf16, #tpu.memory_space<vmem>>, vector<8x768xbf16>
      %c0_11 = arith.constant 0 : index
      %c0_12 = arith.constant 0 : index
      %12 = vector.load %arg3[%c0_11, %c0_12] : memref<768x512xbf16, #tpu.memory_space<vmem>>, vector<768x512xbf16>
      %cst_13 = arith.constant dense<0.000000e+00> : vector<8x512xf32>
      %13 = tpu.matmul %11, %12, %cst_13 {dimension_numbers = #tpu.dot_dimension_numbers<[1], [0], [0], [1], [0, 0, 1, 1], [], []>} : vector<8x768xbf16>, vector<768x512xbf16>, vector<8x512xf32> -> vector<8x512xf32>
      %c0_14 = arith.constant 0 : index
      %c0_15 = arith.constant 0 : index
      %14 = vector.load %arg4[%c0_14, %c0_15] : memref<1x512xf32, #tpu.memory_space<vmem>>, vector<1x512xf32>
      %15 = vector.broadcast %14 : vector<1x512xf32> to vector<8x512xf32>
      %16 = arith.addf %13, %15 : vector<8x512xf32>
      %cst_16 = arith.constant 0.000000e+00 : f32
      %17 = vector.broadcast %cst_16 : f32 to vector<8x512xf32>
      %18 = arith.maximumf %16, %17 : vector<8x512xf32>
      %19 = arith.truncf %18 : vector<8x512xf32> to vector<8x512xbf16>
      %c0_17 = arith.constant 0 : index
      %c0_18 = arith.constant 0 : index
      %20 = vector.load %arg5[%c0_17, %c0_18] : memref<512x128xbf16, #tpu.memory_space<vmem>>, vector<512x128xbf16>
      %cst_19 = arith.constant dense<0.000000e+00> : vector<8x128xf32>
      %21 = tpu.matmul %19, %20, %cst_19 {dimension_numbers = #tpu.dot_dimension_numbers<[1], [0], [0], [1], [0, 0, 1, 1], [], []>} : vector<8x512xbf16>, vector<512x128xbf16>, vector<8x128xf32> -> vector<8x128xf32>
      %c0_20 = arith.constant 0 : index
      %c0_21 = arith.constant 0 : index
      %22 = vector.load %arg6[%c0_20, %c0_21] : memref<1x128xf32, #tpu.memory_space<vmem>>, vector<1x128xf32>
      %23 = vector.broadcast %22 : vector<1x128xf32> to vector<8x128xf32>
      %24 = arith.addf %21, %23 : vector<8x128xf32>
      %cst_22 = arith.constant 0.000000e+00 : f32
      %25 = vector.broadcast %cst_22 : f32 to vector<8x128xf32>
      %26 = arith.maximumf %24, %25 : vector<8x128xf32>
      %27 = arith.truncf %26 : vector<8x128xf32> to vector<8x128xbf16>
      %c0_23 = arith.constant 0 : index
      %c0_24 = arith.constant 0 : index
      %28 = vector.load %arg7[%c0_23, %c0_24] : memref<128x128xbf16, #tpu.memory_space<vmem>>, vector<128x128xbf16>
      %cst_25 = arith.constant dense<0.000000e+00> : vector<8x128xf32>
      %29 = tpu.matmul %27, %28, %cst_25 {dimension_numbers = #tpu.dot_dimension_numbers<[1], [0], [0], [1], [0, 0, 1, 1], [], []>} : vector<8x128xbf16>, vector<128x128xbf16>, vector<8x128xf32> -> vector<8x128xf32>
      %c0_26 = arith.constant 0 : index
      %c0_27 = arith.constant 0 : index
      %30 = vector.load %arg8[%c0_26, %c0_27] : memref<1x128xf32, #tpu.memory_space<vmem>>, vector<1x128xf32>
      %31 = vector.broadcast %30 : vector<1x128xf32> to vector<8x128xf32>
      %32 = arith.addf %29, %31 : vector<8x128xf32>
      %33 = arith.truncf %32 : vector<8x128xf32> to vector<8x128xbf16>
      %c0_28 = arith.constant 0 : index
      %c0_29 = arith.constant 0 : index
      %34 = vector.load %arg9[%c0_28, %c0_29] : memref<8x128xbf16, #tpu.memory_space<vmem>>, vector<8x128xbf16>
      tpu.vector_store %arg9[%c0_28, %c0_29], %33 {strides = array<i32>} : memref<8x128xbf16, #tpu.memory_space<vmem>>, vector<8x128xbf16>,
    } else {
    }
    return
  }
  func.func @transform_0(%arg0: i32, %arg1: i32) -> (i32, i32, i32) {
    %c0_i32 = arith.constant 0 : i32
    %c0_i32_0 = arith.constant 0 : i32
    return %arg0, %arg1, %c0_i32 : i32, i32, i32
  }
  func.func @transform_1(%arg0: i32, %arg1: i32) -> (i32, i32) {
    %c0_i32 = arith.constant 0 : i32
    %c0_i32_0 = arith.constant 0 : i32
    %c0_i32_1 = arith.constant 0 : i32
    return %c0_i32, %c0_i32_0 : i32, i32
  }
  func.func @transform_2(%arg0: i32, %arg1: i32) -> (i32, i32) {
    %c0_i32 = arith.constant 0 : i32
    %c0_i32_0 = arith.constant 0 : i32
    %c0_i32_1 = arith.constant 0 : i32
    return %c0_i32, %c0_i32_0 : i32, i32
  }
  func.func @transform_3(%arg0: i32, %arg1: i32) -> (i32, i32) {
    %c0_i32 = arith.constant 0 : i32
    %c0_i32_0 = arith.constant 0 : i32
    %c0_i32_1 = arith.constant 0 : i32
    return %c0_i32, %c0_i32_0 : i32, i32
  }
  func.func @transform_4(%arg0: i32, %arg1: i32) -> (i32, i32) {
    %c0_i32 = arith.constant 0 : i32
    %c0_i32_0 = arith.constant 0 : i32
    %c0_i32_1 = arith.constant 0 : i32
    return %c0_i32, %c0_i32_0 : i32, i32
  }
  func.func @transform_5(%arg0: i32, %arg1: i32) -> (i32, i32) {
    %c0_i32 = arith.constant 0 : i32
    %c0_i32_0 = arith.constant 0 : i32
    %c0_i32_1 = arith.constant 0 : i32
    return %c0_i32, %c0_i32_0 : i32, i32
  }
  func.func @transform_6(%arg0: i32, %arg1: i32) -> (i32, i32) {
    %c0_i32 = arith.constant 0 : i32
    %c0_i32_0 = arith.constant 0 : i32
    %c0_i32_1 = arith.constant 0 : i32
    return %c0_i32, %c0_i32_0 : i32, i32
  }
  func.func @transform_7(%arg0: i32, %arg1: i32) -> (i32, i32) {
    %c0_i32 = arith.constant 0 : i32
    %c0_i32_0 = arith.constant 0 : i32
    return %arg0, %c0_i32 : i32, i32
  }
}

</mosaic_0001>

<llo_original>
// kernel: tpu_custom_call.1
$region0: #{tpu_custom_call.1}
  #allocation0 [shape = 'u32[]', space=smem, size = 0x4, offset = 0x4, fixed_abs, tag = 'smem constant byte address 0x4 - core index']
  #allocation1 [shape = 'u32[72,128]{1,0:T(1,128)}', space=vmem, size = 0x9000, scoped, tag = 'internal scratch']
  #allocation2 [shape = 'bf16[8,768]{1,0:T(8,128)(2,1)}', space=vmem, size = 0x3000, scoped, tag = 'scratch operand']
  %s0 = inlined_call_operand.hbm [shape: bf16[2,8,768], index: 0, kind: input, shape index: {}]
  %s1 = inlined_call_operand.hbm [shape: bf16[768,512], index: 1, kind: input, shape index: {}]
  %s2 = inlined_call_operand.hbm [shape: f32[1,512], index: 2, kind: input, shape index: {}]
  %s3 = inlined_call_operand.hbm [shape: bf16[512,128], index: 3, kind: input, shape index: {}]
  %s4 = inlined_call_operand.vmem [shape: f32[1,128], index: 4, kind: input, shape index: {}]
  %s5 = inlined_call_operand.hbm [shape: bf16[128,128], index: 5, kind: input, shape index: {}]
  %s6 = inlined_call_operand.vmem [shape: f32[1,128], index: 6, kind: input, shape index: {}]
  %s7 = inlined_call_operand.hbm [shape: bf16[2,128], index: 7, kind: output, shape index: {}]
  %s8 = sld [smem:[#allocation0]]
  $region66: #{tpu_custom_call.1} parent=0
    _
  %s10 = ssub.s32 1, %s8
  %s11 = scalar_select 0, %s10, %s8
  $region1: #{tpu_custom_call.1} parent=0
    #allocation3 [shape = 'u8[98304]{0}', space=vmem, size = 0x18000, scoped, tag = 'input window, operand 0, single buffered']
    #allocation4 [shape = 's32[1]{0}', space=sflag, size = 0x4, scoped, tag = 'scoped memory for tpu_custom_call.1']
    #allocation5 [shape = 's32[1]{0}', space=sflag, size = 0x4, scoped, tag = 'scoped memory for tpu_custom_call.1']
    #allocation6 [shape = 'u8[786432]{0}', space=vmem, size = 0xc0000, scoped, tag = 'input window, operand 1, single buffered']
    #allocation7 [shape = 's32[1]{0}', space=sflag, size = 0x4, scoped, tag = 'scoped memory for tpu_custom_call.1']
    #allocation8 [shape = 'u8[2048]{0}', space=vmem, size = 0x800, scoped, tag = 'input window, operand 2, single buffered']
    #allocation9 [shape = 'u8[131072]{0}', space=vmem, size = 0x20000, scoped, tag = 'input window, operand 3, single buffered']
    #allocation10 [shape = 's32[1]{0}', space=sflag, size = 0x4, scoped, tag = 'scoped memory for tpu_custom_call.1']
    #allocation11 [shape = 'u8[32768]{0}', space=vmem, size = 0x8000, scoped, tag = 'input window, operand 5, single buffered']
    #allocation12 [shape = 'u8[2048]{0}', space=vmem, size = 0x800, scoped, tag = 'output window, operand 0, single buffered']
    %12 = vsyncpa [#allocation4], 0
    %13 = vsyncpa [#allocation7], 0
    %14 = vsyncpa [#allocation10], 0
    %15 = vsyncpa [#allocation5], 0
    // Predicated region
    $region2: #{tpu_custom_call.1} parent=1 // pred_check
      _
    $region3: #{tpu_custom_call.1} parent=1 // pred_check_branch
      %17 = sbr.rel (0) target = $region5
    $region4: #{tpu_custom_call.1} parent=1 // pred_region
      %19 = vsyncadd [#allocation4], 2304
      %s20 = sshll.u32 %s0, 4
      %s21 = int_to_ptr.hbm [resolvable:$true] %s20
      %s22 = sshll.u32 [#allocation3], 4
      %s23 = int_to_ptr.vmem [resolvable:$true] %s22
      %28 = dma.hbm_to_vmem [thread:$0]  %s21, 768, %s23, [#allocation4], 384, 384, 24
    $region5: #{tpu_custom_call.1} parent=1 // pred_fallthru
      _
    // Predicated region
    $region6: #{tpu_custom_call.1} parent=1 // pred_check
      _
    $region7: #{tpu_custom_call.1} parent=1 // pred_check_branch
      %30 = sbr.rel (0) target = $region9
    $region8: #{tpu_custom_call.1} parent=1 // pred_region
      %32 = vsyncadd [#allocation7], 0
      %s33 = sshll.u32 %s1, 4
      %s34 = int_to_ptr.hbm [resolvable:$true] %s33
      %s35 = sshll.u32 [#allocation6], 4
      %s36 = int_to_ptr.vmem [resolvable:$true] %s35
      %41 = dma.hbm_to_vmem [thread:$0]  %s34, 24576, %s36, [#allocation7], 256, 256, 16
    $region9: #{tpu_custom_call.1} parent=1 // pred_fallthru
      _
    // Predicated region
    $region10: #{tpu_custom_call.1} parent=1 // pred_check
      _
    $region11: #{tpu_custom_call.1} parent=1 // pred_check_branch
      %43 = sbr.rel (0) target = $region13
    $region12: #{tpu_custom_call.1} parent=1 // pred_region
      %45 = vsyncadd [#allocation7], 0
      %s47 = sshll.u32 %s2, 4
      %s48 = int_to_ptr.hbm [resolvable:$true] %s47
      %s49 = sshll.u32 [#allocation8], 4
      %s50 = int_to_ptr.vmem [resolvable:$true] %s49
      %52 = dma.hbm_to_vmem [thread:$0]  %s48, 64, %s50, [#allocation7]
    $region13: #{tpu_custom_call.1} parent=1 // pred_fallthru
      _
    // Predicated region
    $region14: #{tpu_custom_call.1} parent=1 // pred_check
      _
    $region15: #{tpu_custom_call.1} parent=1 // pred_check_branch
      %54 = sbr.rel (0) target = $region17
    $region16: #{tpu_custom_call.1} parent=1 // pred_region
      %56 = vsyncadd [#allocation10], 0
      %s57 = sshll.u32 %s3, 4
      %s58 = int_to_ptr.hbm [resolvable:$true] %s57
      %s59 = sshll.u32 [#allocation9], 4
      %s60 = int_to_ptr.vmem [resolvable:$true] %s59
      %65 = dma.hbm_to_vmem [thread:$0]  %s58, 4096, %s60, [#allocation10], 64, 64, 4
    $region17: #{tpu_custom_call.1} parent=1 // pred_fallthru
      _
    // Predicated region
    $region18: #{tpu_custom_call.1} parent=1 // pred_check
      _
    $region19: #{tpu_custom_call.1} parent=1 // pred_check_branch
      %67 = sbr.rel (0) target = $region21
    $region20: #{tpu_custom_call.1} parent=1 // pred_region
      _
    $region21: #{tpu_custom_call.1} parent=1 // pred_fallthru
      _
    // Predicated region
    $region22: #{tpu_custom_call.1} parent=1 // pred_check
      _
    $region23: #{tpu_custom_call.1} parent=1 // pred_check_branch
      %69 = sbr.rel (0) target = $region25
    $region24: #{tpu_custom_call.1} parent=1 // pred_region
      %71 = vsyncadd [#allocation10], 0
      %s72 = sshll.u32 %s5, 4
      %s73 = int_to_ptr.hbm [resolvable:$true] %s72
      %s74 = sshll.u32 [#allocation11], 4
      %s75 = int_to_ptr.vmem [resolvable:$true] %s74
      %80 = dma.hbm_to_vmem [thread:$0]  %s73, 1024, %s75, [#allocation10], 64, 64, 4
    $region25: #{tpu_custom_call.1} parent=1 // pred_fallthru
      _
    // Predicated region
    $region26: #{tpu_custom_call.1} parent=1 // pred_check
      _
    $region27: #{tpu_custom_call.1} parent=1 // pred_check_branch
      %82 = sbr.rel (0) target = $region29
    $region28: #{tpu_custom_call.1} parent=1 // pred_region
      _
    $region29: #{tpu_custom_call.1} parent=1 // pred_fallthru
      _
    // Predicated region
    $region30: #{tpu_custom_call.1} parent=1 // pred_check
      _
    $region31: #{tpu_custom_call.1} parent=1 // pred_check_branch
      %84 = sbr.rel (0) target = $region33
    $region32: #{tpu_custom_call.1} parent=1 // pred_region
      %86 = dma.done [#allocation4], 3072
    $region33: #{tpu_custom_call.1} parent=1 // pred_fallthru
      _
    // Predicated region
    $region34: #{tpu_custom_call.1} parent=1 // pred_check
      _
    $region35: #{tpu_custom_call.1} parent=1 // pred_check_branch
      %88 = sbr.rel (0) target = $region37
    $region36: #{tpu_custom_call.1} parent=1 // pred_region
      %90 = dma.done [#allocation7], 24576
    $region37: #{tpu_custom_call.1} parent=1 // pred_fallthru
      _
    // Predicated region
    $region38: #{tpu_custom_call.1} parent=1 // pred_check
      _
    $region39: #{tpu_custom_call.1} parent=1 // pred_check_branch
      %92 = sbr.rel (0) target = $region41
    $region40: #{tpu_custom_call.1} parent=1 // pred_region
      %94 = dma.done [#allocation7], 64
    $region41: #{tpu_custom_call.1} parent=1 // pred_fallthru
      _
    // Predicated region
    $region42: #{tpu_custom_call.1} parent=1 // pred_check
      _
    $region43: #{tpu_custom_call.1} parent=1 // pred_check_branch
      %96 = sbr.rel (0) target = $region45
    $region44: #{tpu_custom_call.1} parent=1 // pred_region
      %98 = dma.done [#allocation10], 4096
    $region45: #{tpu_custom_call.1} parent=1 // pred_fallthru
      _
    // Predicated region
    $region46: #{tpu_custom_call.1} parent=1 // pred_check
      _
    $region47: #{tpu_custom_call.1} parent=1 // pred_check_branch
      %100 = sbr.rel (0) target = $region49
    $region48: #{tpu_custom_call.1} parent=1 // pred_region
      %102 = dma.done [#allocation10], 1024
    $region49: #{tpu_custom_call.1} parent=1 // pred_fallthru
      _
    %v104 = vld [vmem:[#allocation3] sm:$0xff]
    %v105 = vld [vmem:[#allocation3 + $0x8] sm:$0xff]
    %v106 = vld [vmem:[#allocation3 + $0x10] sm:$0xff]
    %v107 = vld [vmem:[#allocation3 + $0x18] sm:$0xff]
    %v108 = vld [vmem:[#allocation3 + $0x20] sm:$0xff]
    %v109 = vld [vmem:[#allocation3 + $0x28] sm:$0xff]
    %v110 = vld [vmem:[#allocation3 + $0x30] sm:$0xff]
    %v111 = vld [vmem:[#allocation3 + $0x38] sm:$0xff]
    %v112 = vld [vmem:[#allocation3 + $0x40] sm:$0xff]
    %v113 = vld [vmem:[#allocation3 + $0x48] sm:$0xff]
    %v114 = vld [vmem:[#allocation3 + $0x50] sm:$0xff]
    %v115 = vld [vmem:[#allocation3 + $0x58] sm:$0xff]
    %v116 = vld [vmem:[#allocation3 + $0x60] sm:$0xff]
    %v117 = vld [vmem:[#allocation3 + $0x68] sm:$0xff]
    %v118 = vld [vmem:[#allocation3 + $0x70] sm:$0xff]
    %v119 = vld [vmem:[#allocation3 + $0x78] sm:$0xff]
    %v120 = vld [vmem:[#allocation3 + $0x80] sm:$0xff]
    %v121 = vld [vmem:[#allocation3 + $0x88] sm:$0xff]
    %v122 = vld [vmem:[#allocation3 + $0x90] sm:$0xff]
    %v123 = vld [vmem:[#allocation3 + $0x98] sm:$0xff]
    %v124 = vld [vmem:[#allocation3 + $0xa0] sm:$0xff]
    %v125 = vld [vmem:[#allocation3 + $0xa8] sm:$0xff]
    %v126 = vld [vmem:[#allocation3 + $0xb0] sm:$0xff]
    %v127 = vld [vmem:[#allocation3 + $0xb8] sm:$0xff]
    %v128 = vunpack.c.l.bf16 %v104
    %v129 = vunpack.c.h.bf16 %v104
    %v130 = vunpack.c.l.bf16 %v105
    %v131 = vunpack.c.h.bf16 %v105
    %v132 = vunpack.c.l.bf16 %v106
    %v133 = vunpack.c.h.bf16 %v106
    %v134 = vunpack.c.l.bf16 %v107
    %v135 = vunpack.c.h.bf16 %v107
    %v136 = vunpack.c.l.bf16 %v108
    %v137 = vunpack.c.h.bf16 %v108
    %v138 = vunpack.c.l.bf16 %v109
    %v139 = vunpack.c.h.bf16 %v109
    %v140 = vunpack.c.l.bf16 %v110
    %v141 = vunpack.c.h.bf16 %v110
    %v142 = vunpack.c.l.bf16 %v111
    %v143 = vunpack.c.h.bf16 %v111
    %v144 = vunpack.c.l.bf16 %v112
    %v145 = vunpack.c.h.bf16 %v112
    %v146 = vunpack.c.l.bf16 %v113
    %v147 = vunpack.c.h.bf16 %v113
    %v148 = vunpack.c.l.bf16 %v114
    %v149 = vunpack.c.h.bf16 %v114
    %v150 = vunpack.c.l.bf16 %v115
    %v151 = vunpack.c.h.bf16 %v115
    %v152 = vunpack.c.l.bf16 %v116
    %v153 = vunpack.c.h.bf16 %v116
    %v154 = vunpack.c.l.bf16 %v117
    %v155 = vunpack.c.h.bf16 %v117
    %v156 = vunpack.c.l.bf16 %v118
    %v157 = vunpack.c.h.bf16 %v118
    %v158 = vunpack.c.l.bf16 %v119
    %v159 = vunpack.c.h.bf16 %v119
    %v160 = vunpack.c.l.bf16 %v120
    %v161 = vunpack.c.h.bf16 %v120
    %v162 = vunpack.c.l.bf16 %v121
    %v163 = vunpack.c.h.bf16 %v121
    %v164 = vunpack.c.l.bf16 %v122
    %v165 = vunpack.c.h.bf16 %v122
    %v166 = vunpack.c.l.bf16 %v123
    %v167 = vunpack.c.h.bf16 %v123
    %v168 = vunpack.c.l.bf16 %v124
    %v169 = vunpack.c.h.bf16 %v124
    %v170 = vunpack.c.l.bf16 %v125
    %v171 = vunpack.c.h.bf16 %v125
    %v172 = vunpack.c.l.bf16 %v126
    %v173 = vunpack.c.h.bf16 %v126
    %v174 = vunpack.c.l.bf16 %v127
    %v175 = vunpack.c.h.bf16 %v127
    %v176 = vrot.slane %v128, 4
    %v177 = vmax.f32 %v128, %v176
    %v178 = vrot.slane %v177, 2
    %v179 = vmax.f32 %v177, %v178
    %v180 = vrot.slane %v179, 1
    %v181 = vmax.f32 %v179, %v180
    %v182 = vrot.slane %v129, 4
    %v183 = vmax.f32 %v129, %v182
    %v184 = vrot.slane %v183, 2
    %v185 = vmax.f32 %v183, %v184
    %v186 = vrot.slane %v185, 1
    %v187 = vmax.f32 %v185, %v186
    %v188 = vrot.slane %v130, 4
    %v189 = vmax.f32 %v130, %v188
    %v190 = vrot.slane %v189, 2
    %v191 = vmax.f32 %v189, %v190
    %v192 = vrot.slane %v191, 1
    %v193 = vmax.f32 %v191, %v192
    %v194 = vrot.slane %v131, 4
    %v195 = vmax.f32 %v131, %v194
    %v196 = vrot.slane %v195, 2
    %v197 = vmax.f32 %v195, %v196
    %v198 = vrot.slane %v197, 1
    %v199 = vmax.f32 %v197, %v198
    %v200 = vrot.slane %v132, 4
    %v201 = vmax.f32 %v132, %v200
    %v202 = vrot.slane %v201, 2
    %v203 = vmax.f32 %v201, %v202
    %v204 = vrot.slane %v203, 1
    %v205 = vmax.f32 %v203, %v204
    %v206 = vrot.slane %v133, 4
    %v207 = vmax.f32 %v133, %v206
    %v208 = vrot.slane %v207, 2
    %v209 = vmax.f32 %v207, %v208
    %v210 = vrot.slane %v209, 1
    %v211 = vmax.f32 %v209, %v210
    %v212 = vrot.slane %v134, 4
    %v213 = vmax.f32 %v134, %v212
    %v214 = vrot.slane %v213, 2
    %v215 = vmax.f32 %v213, %v214
    %v216 = vrot.slane %v215, 1
    %v217 = vmax.f32 %v215, %v216
    %v218 = vrot.slane %v135, 4
    %v219 = vmax.f32 %v135, %v218
    %v220 = vrot.slane %v219, 2
    %v221 = vmax.f32 %v219, %v220
    %v222 = vrot.slane %v221, 1
    %v223 = vmax.f32 %v221, %v222
    %v224 = vrot.slane %v136, 4
    %v225 = vmax.f32 %v136, %v224
    %v226 = vrot.slane %v225, 2
    %v227 = vmax.f32 %v225, %v226
    %v228 = vrot.slane %v227, 1
    %v229 = vmax.f32 %v227, %v228
    %v230 = vrot.slane %v137, 4
    %v231 = vmax.f32 %v137, %v230
    %v232 = vrot.slane %v231, 2
    %v233 = vmax.f32 %v231, %v232
    %v234 = vrot.slane %v233, 1
    %v235 = vmax.f32 %v233, %v234
    %v236 = vrot.slane %v138, 4
    %v237 = vmax.f32 %v138, %v236
    %v238 = vrot.slane %v237, 2
    %v239 = vmax.f32 %v237, %v238
    %v240 = vrot.slane %v239, 1
    %v241 = vmax.f32 %v239, %v240
    %v242 = vrot.slane %v139, 4
    %v243 = vmax.f32 %v139, %v242
    %v244 = vrot.slane %v243, 2
    %v245 = vmax.f32 %v243, %v244
    %v246 = vrot.slane %v245, 1
    %v247 = vmax.f32 %v245, %v246
    %v248 = vrot.slane %v140, 4
    %v249 = vmax.f32 %v140, %v248
    %v250 = vrot.slane %v249, 2
    %v251 = vmax.f32 %v249, %v250
    %v252 = vrot.slane %v251, 1
    %v253 = vmax.f32 %v251, %v252
    %v254 = vrot.slane %v141, 4
    %v255 = vmax.f32 %v141, %v254
    %v256 = vrot.slane %v255, 2
    %v257 = vmax.f32 %v255, %v256
    %v258 = vrot.slane %v257, 1
    %v259 = vmax.f32 %v257, %v258
    %v260 = vrot.slane %v142, 4
    %v261 = vmax.f32 %v142, %v260
    %v262 = vrot.slane %v261, 2
    %v263 = vmax.f32 %v261, %v262
    %v264 = vrot.slane %v263, 1
    %v265 = vmax.f32 %v263, %v264
    %v266 = vrot.slane %v143, 4
    %v267 = vmax.f32 %v143, %v266
    %v268 = vrot.slane %v267, 2
    %v269 = vmax.f32 %v267, %v268
    %v270 = vrot.slane %v269, 1
    %v271 = vmax.f32 %v269, %v270
    %v272 = vrot.slane %v144, 4
    %v273 = vmax.f32 %v144, %v272
    %v274 = vrot.slane %v273, 2
    %v275 = vmax.f32 %v273, %v274
    %v276 = vrot.slane %v275, 1
    %v277 = vmax.f32 %v275, %v276
    %v278 = vrot.slane %v145, 4
    %v279 = vmax.f32 %v145, %v278
    %v280 = vrot.slane %v279, 2
    %v281 = vmax.f32 %v279, %v280
    %v282 = vrot.slane %v281, 1
    %v283 = vmax.f32 %v281, %v282
    %v284 = vrot.slane %v146, 4
    %v285 = vmax.f32 %v146, %v284
    %v286 = vrot.slane %v285, 2
    %v287 = vmax.f32 %v285, %v286
    %v288 = vrot.slane %v287, 1
    %v289 = vmax.f32 %v287, %v288
    %v290 = vrot.slane %v147, 4
    %v291 = vmax.f32 %v147, %v290
    %v292 = vrot.slane %v291, 2
    %v293 = vmax.f32 %v291, %v292
    %v294 = vrot.slane %v293, 1
    %v295 = vmax.f32 %v293, %v294
    %v296 = vrot.slane %v148, 4
    %v297 = vmax.f32 %v148, %v296
    %v298 = vrot.slane %v297, 2
    %v299 = vmax.f32 %v297, %v298
    %v300 = vrot.slane %v299, 1
    %v301 = vmax.f32 %v299, %v300
    %v302 = vrot.slane %v149, 4
    %v303 = vmax.f32 %v149, %v302
    %v304 = vrot.slane %v303, 2
    %v305 = vmax.f32 %v303, %v304
    %v306 = vrot.slane %v305, 1
    %v307 = vmax.f32 %v305, %v306
    %v308 = vrot.slane %v150, 4
    %v309 = vmax.f32 %v150, %v308
    %v310 = vrot.slane %v309, 2
    %v311 = vmax.f32 %v309, %v310
    %v312 = vrot.slane %v311, 1
    %v313 = vmax.f32 %v311, %v312
    %v314 = vrot.slane %v151, 4
    %v315 = vmax.f32 %v151, %v314
    %v316 = vrot.slane %v315, 2
    %v317 = vmax.f32 %v315, %v316
    %v318 = vrot.slane %v317, 1
    %v319 = vmax.f32 %v317, %v318
    %v320 = vrot.slane %v152, 4
    %v321 = vmax.f32 %v152, %v320
    %v322 = vrot.slane %v321, 2
    %v323 = vmax.f32 %v321, %v322
    %v324 = vrot.slane %v323, 1
    %v325 = vmax.f32 %v323, %v324
    %v326 = vrot.slane %v153, 4
    %v327 = vmax.f32 %v153, %v326
    %v328 = vrot.slane %v327, 2
    %v329 = vmax.f32 %v327, %v328
    %v330 = vrot.slane %v329, 1
    %v331 = vmax.f32 %v329, %v330
    %v332 = vrot.slane %v154, 4
    %v333 = vmax.f32 %v154, %v332
    %v334 = vrot.slane %v333, 2
    %v335 = vmax.f32 %v333, %v334
    %v336 = vrot.slane %v335, 1
    %v337 = vmax.f32 %v335, %v336
    %v338 = vrot.slane %v155, 4
    %v339 = vmax.f32 %v155, %v338
    %v340 = vrot.slane %v339, 2
    %v341 = vmax.f32 %v339, %v340
    %v342 = vrot.slane %v341, 1
    %v343 = vmax.f32 %v341, %v342
    %v344 = vrot.slane %v156, 4
    %v345 = vmax.f32 %v156, %v344
    %v346 = vrot.slane %v345, 2
    %v347 = vmax.f32 %v345, %v346
    %v348 = vrot.slane %v347, 1
    %v349 = vmax.f32 %v347, %v348
    %v350 = vrot.slane %v157, 4
    %v351 = vmax.f32 %v157, %v350
    %v352 = vrot.slane %v351, 2
    %v353 = vmax.f32 %v351, %v352
    %v354 = vrot.slane %v353, 1
    %v355 = vmax.f32 %v353, %v354
    %v356 = vrot.slane %v158, 4
    %v357 = vmax.f32 %v158, %v356
    %v358 = vrot.slane %v357, 2
    %v359 = vmax.f32 %v357, %v358
    %v360 = vrot.slane %v359, 1
    %v361 = vmax.f32 %v359, %v360
    %v362 = vrot.slane %v159, 4
    %v363 = vmax.f32 %v159, %v362
    %v364 = vrot.slane %v363, 2
    %v365 = vmax.f32 %v363, %v364
    %v366 = vrot.slane %v365, 1
    %v367 = vmax.f32 %v365, %v366
    %v368 = vrot.slane %v160, 4
    %v369 = vmax.f32 %v160, %v368
    %v370 = vrot.slane %v369, 2
    %v371 = vmax.f32 %v369, %v370
    %v372 = vrot.slane %v371, 1
    %v373 = vmax.f32 %v371, %v372
    %v374 = vrot.slane %v161, 4
    %v375 = vmax.f32 %v161, %v374
    %v376 = vrot.slane %v375, 2
    %v377 = vmax.f32 %v375, %v376
    %v378 = vrot.slane %v377, 1
    %v379 = vmax.f32 %v377, %v378
    %v380 = vrot.slane %v162, 4
    %v381 = vmax.f32 %v162, %v380
    %v382 = vrot.slane %v381, 2
    %v383 = vmax.f32 %v381, %v382
    %v384 = vrot.slane %v383, 1
    %v385 = vmax.f32 %v383, %v384
    %v386 = vrot.slane %v163, 4
    %v387 = vmax.f32 %v163, %v386
    %v388 = vrot.slane %v387, 2
    %v389 = vmax.f32 %v387, %v388
    %v390 = vrot.slane %v389, 1
    %v391 = vmax.f32 %v389, %v390
    %v392 = vrot.slane %v164, 4
    %v393 = vmax.f32 %v164, %v392
    %v394 = vrot.slane %v393, 2
    %v395 = vmax.f32 %v393, %v394
    %v396 = vrot.slane %v395, 1
    %v397 = vmax.f32 %v395, %v396
    %v398 = vrot.slane %v165, 4
    %v399 = vmax.f32 %v165, %v398
    %v400 = vrot.slane %v399, 2
    %v401 = vmax.f32 %v399, %v400
    %v402 = vrot.slane %v401, 1
    %v403 = vmax.f32 %v401, %v402
    %v404 = vrot.slane %v166, 4
    %v405 = vmax.f32 %v166, %v404
    %v406 = vrot.slane %v405, 2
    %v407 = vmax.f32 %v405, %v406
    %v408 = vrot.slane %v407, 1
    %v409 = vmax.f32 %v407, %v408
    %v410 = vrot.slane %v167, 4
    %v411 = vmax.f32 %v167, %v410
    %v412 = vrot.slane %v411, 2
    %v413 = vmax.f32 %v411, %v412
    %v414 = vrot.slane %v413, 1
    %v415 = vmax.f32 %v413, %v414
    %v416 = vrot.slane %v168, 4
    %v417 = vmax.f32 %v168, %v416
    %v418 = vrot.slane %v417, 2
    %v419 = vmax.f32 %v417, %v418
    %v420 = vrot.slane %v419, 1
    %v421 = vmax.f32 %v419, %v420
    %v422 = vrot.slane %v169, 4
    %v423 = vmax.f32 %v169, %v422
    %v424 = vrot.slane %v423, 2
    %v425 = vmax.f32 %v423, %v424
    %v426 = vrot.slane %v425, 1
    %v427 = vmax.f32 %v425, %v426
    %v428 = vrot.slane %v170, 4
    %v429 = vmax.f32 %v170, %v428
    %v430 = vrot.slane %v429, 2
    %v431 = vmax.f32 %v429, %v430
    %v432 = vrot.slane %v431, 1
    %v433 = vmax.f32 %v431, %v432
    %v434 = vrot.slane %v171, 4
    %v435 = vmax.f32 %v171, %v434
    %v436 = vrot.slane %v435, 2
    %v437 = vmax.f32 %v435, %v436
    %v438 = vrot.slane %v437, 1
    %v439 = vmax.f32 %v437, %v438
    %v440 = vrot.slane %v172, 4
    %v441 = vmax.f32 %v172, %v440
    %v442 = vrot.slane %v441, 2
    %v443 = vmax.f32 %v441, %v442
    %v444 = vrot.slane %v443, 1
    %v445 = vmax.f32 %v443, %v444
    %v446 = vrot.slane %v173, 4
    %v447 = vmax.f32 %v173, %v446
    %v448 = vrot.slane %v447, 2
    %v449 = vmax.f32 %v447, %v448
    %v450 = vrot.slane %v449, 1
    %v451 = vmax.f32 %v449, %v450
    %v452 = vrot.slane %v174, 4
    %v453 = vmax.f32 %v174, %v452
    %v454 = vrot.slane %v453, 2
    %v455 = vmax.f32 %v453, %v454
    %v456 = vrot.slane %v455, 1
    %v457 = vmax.f32 %v455, %v456
    %v458 = vrot.slane %v175, 4
    %v459 = vmax.f32 %v175, %v458
    %v460 = vrot.slane %v459, 2
    %v461 = vmax.f32 %v459, %v460
    %v462 = vrot.slane %v461, 1
    %v463 = vmax.f32 %v461, %v462
    %v464 = vpack.c.bf16 %v187, %v181
    %v465 = vpack.c.bf16 %v199, %v193
    %v466 = vpack.c.bf16 %v211, %v205
    %v467 = vpack.c.bf16 %v223, %v217
    %v468 = vpack.c.bf16 %v235, %v229
    %v469 = vpack.c.bf16 %v247, %v241
    %v470 = vpack.c.bf16 %v259, %v253
    %v471 = vpack.c.bf16 %v271, %v265
    %v472 = vpack.c.bf16 %v283, %v277
    %v473 = vpack.c.bf16 %v295, %v289
    %v474 = vpack.c.bf16 %v307, %v301
    %v475 = vpack.c.bf16 %v319, %v313
    %v476 = vpack.c.bf16 %v331, %v325
    %v477 = vpack.c.bf16 %v343, %v337
    %v478 = vpack.c.bf16 %v355, %v349
    %v479 = vpack.c.bf16 %v367, %v361
    %v480 = vpack.c.bf16 %v379, %v373
    %v481 = vpack.c.bf16 %v391, %v385
    %v482 = vpack.c.bf16 %v403, %v397
    %v483 = vpack.c.bf16 %v415, %v409
    %v484 = vpack.c.bf16 %v427, %v421
    %v485 = vpack.c.bf16 %v439, %v433
    %v486 = vpack.c.bf16 %v451, %v445
    %v487 = vpack.c.bf16 %v463, %v457
    %p488 = scmp.eq.s32.totalorder 0, 0
    // Predicated region
    $region50: #{tpu_custom_call.1} parent=1 // pred_check
      %p489 = pneg %p488
    $region51: #{tpu_custom_call.1} parent=1 // pred_check_branch
      %491 = sbr.rel (%p489) target = $region53
    $region52: #{tpu_custom_call.1} parent=1 // pred_region
      %492 = vst [vmem:[#allocation2] sm:$0xff] 4286644096
      %493 = vst [vmem:[#allocation2 + $0x8] sm:$0xff] 4286644096
      %494 = vst [vmem:[#allocation2 + $0x10] sm:$0xff] 4286644096
    $region53: #{tpu_custom_call.1} parent=1 // pred_fallthru
      _
    %v495 = vld [vmem:[#allocation2] sm:$0xff]
    %v496 = vld [vmem:[#allocation2 + $0x8] sm:$0xff]
    %v497 = vld [vmem:[#allocation2 + $0x10] sm:$0xff]
    %v498 = vunpack.c.l.bf16 %v495
    %v499 = vunpack.c.h.bf16 %v495
    %v500 = vunpack.c.l.bf16 %v496
    %v501 = vunpack.c.h.bf16 %v496
    %v502 = vunpack.c.l.bf16 %v497
    %v503 = vunpack.c.h.bf16 %v497
    %v504 = vunpack.c.l.bf16 %v464
    %v505 = vunpack.c.h.bf16 %v464
    %v506 = vunpack.c.l.bf16 %v465
    %v507 = vunpack.c.h.bf16 %v465
    %v508 = vunpack.c.l.bf16 %v466
    %v509 = vunpack.c.h.bf16 %v466
    %v510 = vunpack.c.l.bf16 %v467
    %v511 = vunpack.c.h.bf16 %v467
    %v512 = vunpack.c.l.bf16 %v468
    %v513 = vunpack.c.h.bf16 %v468
    %v514 = vunpack.c.l.bf16 %v469
    %v515 = vunpack.c.h.bf16 %v469
    %v516 = vunpack.c.l.bf16 %v470
    %v517 = vunpack.c.h.bf16 %v470
    %v518 = vunpack.c.l.bf16 %v471
    %v519 = vunpack.c.h.bf16 %v471
    %v520 = vunpack.c.l.bf16 %v472
    %v521 = vunpack.c.h.bf16 %v472
    %v522 = vunpack.c.l.bf16 %v473
    %v523 = vunpack.c.h.bf16 %v473
    %v524 = vunpack.c.l.bf16 %v474
    %v525 = vunpack.c.h.bf16 %v474
    %v526 = vunpack.c.l.bf16 %v475
    %v527 = vunpack.c.h.bf16 %v475
    %v528 = vunpack.c.l.bf16 %v476
    %v529 = vunpack.c.h.bf16 %v476
    %v530 = vunpack.c.l.bf16 %v477
    %v531 = vunpack.c.h.bf16 %v477
    %v532 = vunpack.c.l.bf16 %v478
    %v533 = vunpack.c.h.bf16 %v478
    %v534 = vunpack.c.l.bf16 %v479
    %v535 = vunpack.c.h.bf16 %v479
    %v536 = vunpack.c.l.bf16 %v480
    %v537 = vunpack.c.h.bf16 %v480
    %v538 = vunpack.c.l.bf16 %v481
    %v539 = vunpack.c.h.bf16 %v481
    %v540 = vunpack.c.l.bf16 %v482
    %v541 = vunpack.c.h.bf16 %v482
    %v542 = vunpack.c.l.bf16 %v483
    %v543 = vunpack.c.h.bf16 %v483
    %v544 = vunpack.c.l.bf16 %v484
    %v545 = vunpack.c.h.bf16 %v484
    %v546 = vunpack.c.l.bf16 %v485
    %v547 = vunpack.c.h.bf16 %v485
    %v548 = vunpack.c.l.bf16 %v486
    %v549 = vunpack.c.h.bf16 %v486
    %v550 = vunpack.c.l.bf16 %v487
    %v551 = vunpack.c.h.bf16 %v487
    %vm600 = vcmask 1041409
    %v601 = vsel %vm600, %v510, %v504
    %vm602 = vcmask 1042434
    %v603 = vsel %vm602, %v516, %v601
    %vm604 = vcmask 1043459
    %v605 = vsel %vm604, %v522, %v603
    %vm606 = vcmask 1044484
    %v607 = vsel %vm606, %v528, %v605
    %vm608 = vcmask 1045509
    %v609 = vsel %vm608, %v534, %v607
    %vm610 = vcmask 1046534
    %v611 = vsel %vm610, %v540, %v609
    %vm612 = vcmask 1047559
    %v613 = vsel %vm612, %v546, %v611
    %v614 = vsel %vm600, %v511, %v505
    %v615 = vsel %vm602, %v517, %v614
    %v616 = vsel %vm604, %v523, %v615
    %v617 = vsel %vm606, %v529, %v616
    %v618 = vsel %vm608, %v535, %v617
    %v619 = vsel %vm610, %v541, %v618
    %v620 = vsel %vm612, %v547, %v619
    %v621 = vsel %vm600, %v512, %v506
    %v622 = vsel %vm602, %v518, %v621
    %v623 = vsel %vm604, %v524, %v622
    %v624 = vsel %vm606, %v530, %v623
    %v625 = vsel %vm608, %v536, %v624
    %v626 = vsel %vm610, %v542, %v625
    %v627 = vsel %vm612, %v548, %v626
    %v628 = vsel %vm600, %v513, %v507
    %v629 = vsel %vm602, %v519, %v628
    %v630 = vsel %vm604, %v525, %v629
    %v631 = vsel %vm606, %v531, %v630
    %v632 = vsel %vm608, %v537, %v631
    %v633 = vsel %vm610, %v543, %v632
    %v634 = vsel %vm612, %v549, %v633
    %v635 = vsel %vm600, %v514, %v508
    %v636 = vsel %vm602, %v520, %v635
    %v637 = vsel %vm604, %v526, %v636
    %v638 = vsel %vm606, %v532, %v637
    %v639 = vsel %vm608, %v538, %v638
    %v640 = vsel %vm610, %v544, %v639
    %v641 = vsel %vm612, %v550, %v640
    %v642 = vsel %vm600, %v515, %v509
    %v643 = vsel %vm602, %v521, %v642
    %v644 = vsel %vm604, %v527, %v643
    %v645 = vsel %vm606, %v533, %v644
    %v646 = vsel %vm608, %v539, %v645
    %v647 = vsel %vm610, %v545, %v646
    %v648 = vsel %vm612, %v551, %v647
    %v655 = vmax.f32 %v498, %v613
    %v656 = vmax.f32 %v499, %v620
    %v657 = vmax.f32 %v500, %v627
    %v658 = vmax.f32 %v501, %v634
    %v659 = vmax.f32 %v502, %v641
    %v660 = vmax.f32 %v503, %v648
    %v661 = vpack.c.bf16 %v656, %v655
    %v662 = vpack.c.bf16 %v658, %v657
    %v663 = vpack.c.bf16 %v660, %v659
    %664 = vst [vmem:[#allocation2] sm:$0xff] %v661
    %665 = vst [vmem:[#allocation2 + $0x8] sm:$0xff] %v662
    %666 = vst [vmem:[#allocation2 + $0x10] sm:$0xff] %v663
    // Predicated region
    $region54: #{tpu_custom_call.1} parent=1 // pred_check
      %p667 = pneg %p488
    $region55: #{tpu_custom_call.1} parent=1 // pred_check_branch
      %669 = sbr.rel (%p667) target = $region57
    $region56: #{tpu_custom_call.1} parent=1 // pred_region
      %v670 = vld [vmem:[#allocation2] sm:$0xff]
      %v671 = vld [vmem:[#allocation2 + $0x8] sm:$0xff]
      %v672 = vld [vmem:[#allocation2 + $0x10] sm:$0xff]
      %v673 = vld [vmem:[#allocation6] sm:$0xff]
      %v674 = vld [vmem:[#allocation6 + $0x8] sm:$0xff]
      %v675 = vld [vmem:[#allocation6 + $0x10] sm:$0xff]
      %v676 = vld [vmem:[#allocation6 + $0x18] sm:$0xff]
      %v677 = vld [vmem:[#allocation6 + $0x20] sm:$0xff]
      %v678 = vld [vmem:[#allocation6 + $0x28] sm:$0xff]
      %v679 = vld [vmem:[#allocation6 + $0x30] sm:$0xff]
      %v680 = vld [vmem:[#allocation6 + $0x38] sm:$0xff]
      %v681 = vld [vmem:[#allocation6 + $0x40] sm:$0xff]
      %v682 = vld [vmem:[#allocation6 + $0x48] sm:$0xff]
      %v683 = vld [vmem:[#allocation6 + $0x50] sm:$0xff]
      %v684 = vld [vmem:[#allocation6 + $0x58] sm:$0xff]
      %v685 = vld [vmem:[#allocation6 + $0x60] sm:$0xff]
      %v686 = vld [vmem:[#allocation6 + $0x68] sm:$0xff]
      %v687 = vld [vmem:[#allocation6 + $0x70] sm:$0xff]
      %v688 = vld [vmem:[#allocation6 + $0x78] sm:$0xff]
      %v689 = vld [vmem:[#allocation6 + $0x80] sm:$0xff]
      %v690 = vld [vmem:[#allocation6 + $0x88] sm:$0xff]
      %v691 = vld [vmem:[#allocation6 + $0x90] sm:$0xff]
      %v692 = vld [vmem:[#allocation6 + $0x98] sm:$0xff]
      %v693 = vld [vmem:[#allocation6 + $0xa0] sm:$0xff]
      %v694 = vld [vmem:[#allocation6 + $0xa8] sm:$0xff]
      %v695 = vld [vmem:[#allocation6 + $0xb0] sm:$0xff]
      %v696 = vld [vmem:[#allocation6 + $0xb8] sm:$0xff]
      %v697 = vld [vmem:[#allocation6 + $0xc0] sm:$0xff]
      %v698 = vld [vmem:[#allocation6 + $0xc8] sm:$0xff]
      %v699 = vld [vmem:[#allocation6 + $0xd0] sm:$0xff]
      %v700 = vld [vmem:[#allocation6 + $0xd8] sm:$0xff]
      %v701 = vld [vmem:[#allocation6 + $0xe0] sm:$0xff]
      %v702 = vld [vmem:[#allocation6 + $0xe8] sm:$0xff]
      %v703 = vld [vmem:[#allocation6 + $0xf0] sm:$0xff]
      %v704 = vld [vmem:[#allocation6 + $0xf8] sm:$0xff]
      %v705 = vld [vmem:[#allocation6 + $0x100] sm:$0xff]
      %v706 = vld [vmem:[#allocation6 + $0x108] sm:$0xff]
      %v707 = vld [vmem:[#allocation6 + $0x110] sm:$0xff]
      %v708 = vld [vmem:[#allocation6 + $0x118] sm:$0xff]
      %v709 = vld [vmem:[#allocation6 + $0x120] sm:$0xff]
      %v710 = vld [vmem:[#allocation6 + $0x128] sm:$0xff]
      %v711 = vld [vmem:[#allocation6 + $0x130] sm:$0xff]
      %v712 = vld [vmem:[#allocation6 + $0x138] sm:$0xff]
      %v713 = vld [vmem:[#allocation6 + $0x140] sm:$0xff]
      %v714 = vld [vmem:[#allocation6 + $0x148] sm:$0xff]
      %v715 = vld [vmem:[#allocation6 + $0x150] sm:$0xff]
      %v716 = vld [vmem:[#allocation6 + $0x158] sm:$0xff]
      %v717 = vld [vmem:[#allocation6 + $0x160] sm:$0xff]
      %v718 = vld [vmem:[#allocation6 + $0x168] sm:$0xff]
      %v719 = vld [vmem:[#allocation6 + $0x170] sm:$0xff]
      %v720 = vld [vmem:[#allocation6 + $0x178] sm:$0xff]
      %v721 = vld [vmem:[#allocation6 + $0x180] sm:$0xff]
      %v722 = vld [vmem:[#allocation6 + $0x188] sm:$0xff]
      %v723 = vld [vmem:[#allocation6 + $0x190] sm:$0xff]
      %v724 = vld [vmem:[#allocation6 + $0x198] sm:$0xff]
      %v725 = vld [vmem:[#allocation6 + $0x1a0] sm:$0xff]
      %v726 = vld [vmem:[#allocation6 + $0x1a8] sm:$0xff]
      %v727 = vld [vmem:[#allocation6 + $0x1b0] sm:$0xff]
      %v728 = vld [vmem:[#allocation6 + $0x1b8] sm:$0xff]
      %v729 = vld [vmem:[#allocation6 + $0x1c0] sm:$0xff]
      %v730 = vld [vmem:[#allocation6 + $0x1c8] sm:$0xff]
      %v731 = vld [vmem:[#allocation6 + $0x1d0] sm:$0xff]
      %v732 = vld [vmem:[#allocation6 + $0x1d8] sm:$0xff]
      %v733 = vld [vmem:[#allocation6 + $0x1e0] sm:$0xff]
      %v734 = vld [vmem:[#allocation6 + $0x1e8] sm:$0xff]
      %v735 = vld [vmem:[#allocation6 + $0x1f0] sm:$0xff]
      %v736 = vld [vmem:[#allocation6 + $0x1f8] sm:$0xff]
      %v737 = vld [vmem:[#allocation6 + $0x200] sm:$0xff]
      %v738 = vld [vmem:[#allocation6 + $0x208] sm:$0xff]
      %v739 = vld [vmem:[#allocation6 + $0x210] sm:$0xff]
      %v740 = vld [vmem:[#allocation6 + $0x218] sm:$0xff]
      %v741 = vld [vmem:[#allocation6 + $0x220] sm:$0xff]
      %v742 = vld [vmem:[#allocation6 + $0x228] sm:$0xff]
      %v743 = vld [vmem:[#allocation6 + $0x230] sm:$0xff]
      %v744 = vld [vmem:[#allocation6 + $0x238] sm:$0xff]
      %v745 = vld [vmem:[#allocation6 + $0x240] sm:$0xff]
      %v746 = vld [vmem:[#allocation6 + $0x248] sm:$0xff]
      %v747 = vld [vmem:[#allocation6 + $0x250] sm:$0xff]
      %v748 = vld [vmem:[#allocation6 + $0x258] sm:$0xff]
      %v749 = vld [vmem:[#allocation6 + $0x260] sm:$0xff]
      %v750 = vld [vmem:[#allocation6 + $0x268] sm:$0xff]
      %v751 = vld [vmem:[#allocation6 + $0x270] sm:$0xff]
      %v752 = vld [vmem:[#allocation6 + $0x278] sm:$0xff]
      %v753 = vld [vmem:[#allocation6 + $0x280] sm:$0xff]
      %v754 = vld [vmem:[#allocation6 + $0x288] sm:$0xff]
      %v755 = vld [vmem:[#allocation6 + $0x290] sm:$0xff]
      %v756 = vld [vmem:[#allocation6 + $0x298] sm:$0xff]
      %v757 = vld [vmem:[#allocation6 + $0x2a0] sm:$0xff]
      %v758 = vld [vmem:[#allocation6 + $0x2a8] sm:$0xff]
      %v759 = vld [vmem:[#allocation6 + $0x2b0] sm:$0xff]
      %v760 = vld [vmem:[#allocation6 + $0x2b8] sm:$0xff]
      %v761 = vld [vmem:[#allocation6 + $0x2c0] sm:$0xff]
      %v762 = vld [vmem:[#allocation6 + $0x2c8] sm:$0xff]
      %v763 = vld [vmem:[#allocation6 + $0x2d0] sm:$0xff]
      %v764 = vld [vmem:[#allocation6 + $0x2d8] sm:$0xff]
      %v765 = vld [vmem:[#allocation6 + $0x2e0] sm:$0xff]
      %v766 = vld [vmem:[#allocation6 + $0x2e8] sm:$0xff]
      %v767 = vld [vmem:[#allocation6 + $0x2f0] sm:$0xff]
      %v768 = vld [vmem:[#allocation6 + $0x2f8] sm:$0xff]
      %v769 = vld [vmem:[#allocation6 + $0x300] sm:$0xff]
      %v770 = vld [vmem:[#allocation6 + $0x308] sm:$0xff]
      %v771 = vld [vmem:[#allocation6 + $0x310] sm:$0xff]
      %v772 = vld [vmem:[#allocation6 + $0x318] sm:$0xff]
      %v773 = vld [vmem:[#allocation6 + $0x320] sm:$0xff]
      %v774 = vld [vmem:[#allocation6 + $0x328] sm:$0xff]
      %v775 = vld [vmem:[#allocation6 + $0x330] sm:$0xff]
      %v776 = vld [vmem:[#allocation6 + $0x338] sm:$0xff]
      %v777 = vld [vmem:[#allocation6 + $0x340] sm:$0xff]
      %v778 = vld [vmem:[#allocation6 + $0x348] sm:$0xff]
      %v779 = vld [vmem:[#allocation6 + $0x350] sm:$0xff]
      %v780 = vld [vmem:[#allocation6 + $0x358] sm:$0xff]
      %v781 = vld [vmem:[#allocation6 + $0x360] sm:$0xff]
      %v782 = vld [vmem:[#allocation6 + $0x368] sm:$0xff]
      %v783 = vld [vmem:[#allocation6 + $0x370] sm:$0xff]
      %v784 = vld [vmem:[#allocation6 + $0x378] sm:$0xff]
      %v785 = vld [vmem:[#allocation6 + $0x380] sm:$0xff]
      %v786 = vld [vmem:[#allocation6 + $0x388] sm:$0xff]
      %v787 = vld [vmem:[#allocation6 + $0x390] sm:$0xff]
      %v788 = vld [vmem:[#allocation6 + $0x398] sm:$0xff]
      %v789 = vld [vmem:[#allocation6 + $0x3a0] sm:$0xff]
      %v790 = vld [vmem:[#allocation6 + $0x3a8] sm:$0xff]
      %v791 = vld [vmem:[#allocation6 + $0x3b0] sm:$0xff]
      %v792 = vld [vmem:[#allocation6 + $0x3b8] sm:$0xff]
      %v793 = vld [vmem:[#allocation6 + $0x3c0] sm:$0xff]
      %v794 = vld [vmem:[#allocation6 + $0x3c8] sm:$0xff]
      %v795 = vld [vmem:[#allocation6 + $0x3d0] sm:$0xff]
      %v796 = vld [vmem:[#allocation6 + $0x3d8] sm:$0xff]
      %v797 = vld [vmem:[#allocation6 + $0x3e0] sm:$0xff]
      %v798 = vld [vmem:[#allocation6 + $0x3e8] sm:$0xff]
      %v799 = vld [vmem:[#allocation6 + $0x3f0] sm:$0xff]
      %v800 = vld [vmem:[#allocation6 + $0x3f8] sm:$0xff]
      %v801 = vld [vmem:[#allocation6 + $0x400] sm:$0xff]
      %v802 = vld [vmem:[#allocation6 + $0x408] sm:$0xff]
      %v803 = vld [vmem:[#allocation6 + $0x410] sm:$0xff]
      %v804 = vld [vmem:[#allocation6 + $0x418] sm:$0xff]
      %v805 = vld [vmem:[#allocation6 + $0x420] sm:$0xff]
      %v806 = vld [vmem:[#allocation6 + $0x428] sm:$0xff]
      %v807 = vld [vmem:[#allocation6 + $0x430] sm:$0xff]
      %v808 = vld [vmem:[#allocation6 + $0x438] sm:$0xff]
      %v809 = vld [vmem:[#allocation6 + $0x440] sm:$0xff]
      %v810 = vld [vmem:[#allocation6 + $0x448] sm:$0xff]
      %v811 = vld [vmem:[#allocation6 + $0x450] sm:$0xff]
      %v812 = vld [vmem:[#allocation6 + $0x458] sm:$0xff]
      %v813 = vld [vmem:[#allocation6 + $0x460] sm:$0xff]
      %v814 = vld [vmem:[#allocation6 + $0x468] sm:$0xff]
      %v815 = vld [vmem:[#allocation6 + $0x470] sm:$0xff]
      %v816 = vld [vmem:[#allocation6 + $0x478] sm:$0xff]
      %v817 = vld [vmem:[#allocation6 + $0x480] sm:$0xff]
      %v818 = vld [vmem:[#allocation6 + $0x488] sm:$0xff]
      %v819 = vld [vmem:[#allocation6 + $0x490] sm:$0xff]
      %v820 = vld [vmem:[#allocation6 + $0x498] sm:$0xff]
      %v821 = vld [vmem:[#allocation6 + $0x4a0] sm:$0xff]
      %v822 = vld [vmem:[#allocation6 + $0x4a8] sm:$0xff]
      %v823 = vld [vmem:[#allocation6 + $0x4b0] sm:$0xff]
      %v824 = vld [vmem:[#allocation6 + $0x4b8] sm:$0xff]
      %v825 = vld [vmem:[#allocation6 + $0x4c0] sm:$0xff]
      %v826 = vld [vmem:[#allocation6 + $0x4c8] sm:$0xff]
      %v827 = vld [vmem:[#allocation6 + $0x4d0] sm:$0xff]
      %v828 = vld [vmem:[#allocation6 + $0x4d8] sm:$0xff]
      %v829 = vld [vmem:[#allocation6 + $0x4e0] sm:$0xff]
      %v830 = vld [vmem:[#allocation6 + $0x4e8] sm:$0xff]
      %v831 = vld [vmem:[#allocation6 + $0x4f0] sm:$0xff]
      %v832 = vld [vmem:[#allocation6 + $0x4f8] sm:$0xff]
      %v833 = vld [vmem:[#allocation6 + $0x500] sm:$0xff]
      %v834 = vld [vmem:[#allocation6 + $0x508] sm:$0xff]
      %v835 = vld [vmem:[#allocation6 + $0x510] sm:$0xff]
      %v836 = vld [vmem:[#allocation6 + $0x518] sm:$0xff]
      %v837 = vld [vmem:[#allocation6 + $0x520] sm:$0xff]
      %v838 = vld [vmem:[#allocation6 + $0x528] sm:$0xff]
      %v839 = vld [vmem:[#allocation6 + $0x530] sm:$0xff]
      %v840 = vld [vmem:[#allocation6 + $0x538] sm:$0xff]
      %v841 = vld [vmem:[#allocation6 + $0x540] sm:$0xff]
      %v842 = vld [vmem:[#allocation6 + $0x548] sm:$0xff]
      %v843 = vld [vmem:[#allocation6 + $0x550] sm:$0xff]
      %v844 = vld [vmem:[#allocation6 + $0x558] sm:$0xff]
      %v845 = vld [vmem:[#allocation6 + $0x560] sm:$0xff]
      %v846 = vld [vmem:[#allocation6 + $0x568] sm:$0xff]
      %v847 = vld [vmem:[#allocation6 + $0x570] sm:$0xff]
      %v848 = vld [vmem:[#allocation6 + $0x578] sm:$0xff]
      %v849 = vld [vmem:[#allocation6 + $0x580] sm:$0xff]
      %v850 = vld [vmem:[#allocation6 + $0x588] sm:$0xff]
      %v851 = vld [vmem:[#allocation6 + $0x590] sm:$0xff]
      %v852 = vld [vmem:[#allocation6 + $0x598] sm:$0xff]
      %v853 = vld [vmem:[#allocation6 + $0x5a0] sm:$0xff]
      %v854 = vld [vmem:[#allocation6 + $0x5a8] sm:$0xff]
      %v855 = vld [vmem:[#allocation6 + $0x5b0] sm:$0xff]
      %v856 = vld [vmem:[#allocation6 + $0x5b8] sm:$0xff]
      %v857 = vld [vmem:[#allocation6 + $0x5c0] sm:$0xff]
      %v858 = vld [vmem:[#allocation6 + $0x5c8] sm:$0xff]
      %v859 = vld [vmem:[#allocation6 + $0x5d0] sm:$0xff]
      %v860 = vld [vmem:[#allocation6 + $0x5d8] sm:$0xff]
      %v861 = vld [vmem:[#allocation6 + $0x5e0] sm:$0xff]
      %v862 = vld [vmem:[#allocation6 + $0x5e8] sm:$0xff]
      %v863 = vld [vmem:[#allocation6 + $0x5f0] sm:$0xff]
      %v864 = vld [vmem:[#allocation6 + $0x5f8] sm:$0xff]
      %v865 = vld [vmem:[#allocation8] sm:$0xf]
      %v867 = vperm.slane %v865, 0
      %v868 = vperm.slane %v865, 1
      %v869 = vperm.slane %v865, 2
      %v870 = vperm.slane %v865, 3
      %v878 = vunpack.c.l.b16 %v670
      %v879 = vunpack.c.h.b16 %v670
      %v880 = vunpack.c.l.b16 %v671
      %v881 = vunpack.c.h.b16 %v671
      %v882 = vunpack.c.l.b16 %v672
      %v883 = vunpack.c.h.b16 %v672
      %v884 = vpack.c.b16 %v878, %v878
      %v885 = vpack.c.b16 %v879, %v879
      %v886 = vpack.c.b16 %v880, %v880
      %v887 = vpack.c.b16 %v881, %v881
      %v888 = vpack.c.b16 %v882, %v882
      %v889 = vpack.c.b16 %v883, %v883
      %v1088 = vunpack.c.l.b16 %v673
      %v1089 = vunpack.c.h.b16 %v673
      %v1090 = vunpack.c.l.b16 %v674
      %v1091 = vunpack.c.h.b16 %v674
      %v1092 = vunpack.c.l.b16 %v675
      %v1093 = vunpack.c.h.b16 %v675
      %v1094 = vunpack.c.l.b16 %v676
      %v1095 = vunpack.c.h.b16 %v676
      %v1096 = vunpack.c.l.b16 %v677
      %v1097 = vunpack.c.h.b16 %v677
      %v1098 = vunpack.c.l.b16 %v678
      %v1099 = vunpack.c.h.b16 %v678
      %v1100 = vunpack.c.l.b16 %v679
      %v1101 = vunpack.c.h.b16 %v679
      %v1102 = vunpack.c.l.b16 %v680
      %v1103 = vunpack.c.h.b16 %v680
      %v1104 = vunpack.c.l.b16 %v681
      %v1105 = vunpack.c.h.b16 %v681
      %v1106 = vunpack.c.l.b16 %v682
      %v1107 = vunpack.c.h.b16 %v682
      %v1108 = vunpack.c.l.b16 %v683
      %v1109 = vunpack.c.h.b16 %v683
      %v1110 = vunpack.c.l.b16 %v684
      %v1111 = vunpack.c.h.b16 %v684
      %v1112 = vunpack.c.l.b16 %v685
      %v1113 = vunpack.c.h.b16 %v685
      %v1114 = vunpack.c.l.b16 %v686
      %v1115 = vunpack.c.h.b16 %v686
      %v1116 = vunpack.c.l.b16 %v687
      %v1117 = vunpack.c.h.b16 %v687
      %v1118 = vunpack.c.l.b16 %v688
      %v1119 = vunpack.c.h.b16 %v688
      %v1120 = vunpack.c.l.b16 %v689
      %v1121 = vunpack.c.h.b16 %v689
      %v1122 = vunpack.c.l.b16 %v690
      %v1123 = vunpack.c.h.b16 %v690
      %v1124 = vunpack.c.l.b16 %v691
      %v1125 = vunpack.c.h.b16 %v691
      %v1126 = vunpack.c.l.b16 %v692
      %v1127 = vunpack.c.h.b16 %v692
      %v1128 = vunpack.c.l.b16 %v693
      %v1129 = vunpack.c.h.b16 %v693
      %v1130 = vunpack.c.l.b16 %v694
      %v1131 = vunpack.c.h.b16 %v694
      %v1132 = vunpack.c.l.b16 %v695
      %v1133 = vunpack.c.h.b16 %v695
      %v1134 = vunpack.c.l.b16 %v696
      %v1135 = vunpack.c.h.b16 %v696
      %v1136 = vunpack.c.l.b16 %v697
      %v1137 = vunpack.c.h.b16 %v697
      %v1138 = vunpack.c.l.b16 %v698
      %v1139 = vunpack.c.h.b16 %v698
      %v1140 = vunpack.c.l.b16 %v699
      %v1141 = vunpack.c.h.b16 %v699
      %v1142 = vunpack.c.l.b16 %v700
      %v1143 = vunpack.c.h.b16 %v700
      %v1144 = vunpack.c.l.b16 %v701
      %v1145 = vunpack.c.h.b16 %v701
      %v1146 = vunpack.c.l.b16 %v702
      %v1147 = vunpack.c.h.b16 %v702
      %v1148 = vunpack.c.l.b16 %v703
      %v1149 = vunpack.c.h.b16 %v703
      %v1150 = vunpack.c.l.b16 %v704
      %v1151 = vunpack.c.h.b16 %v704
      %v1152 = vunpack.c.l.b16 %v705
      %v1153 = vunpack.c.h.b16 %v705
      %v1154 = vunpack.c.l.b16 %v706
      %v1155 = vunpack.c.h.b16 %v706
      %v1156 = vunpack.c.l.b16 %v707
      %v1157 = vunpack.c.h.b16 %v707
      %v1158 = vunpack.c.l.b16 %v708
      %v1159 = vunpack.c.h.b16 %v708
      %v1160 = vunpack.c.l.b16 %v709
      %v1161 = vunpack.c.h.b16 %v709
      %v1162 = vunpack.c.l.b16 %v710
      %v1163 = vunpack.c.h.b16 %v710
      %v1164 = vunpack.c.l.b16 %v711
      %v1165 = vunpack.c.h.b16 %v711
      %v1166 = vunpack.c.l.b16 %v712
      %v1167 = vunpack.c.h.b16 %v712
      %v1168 = vunpack.c.l.b16 %v713
      %v1169 = vunpack.c.h.b16 %v713
      %v1170 = vunpack.c.l.b16 %v714
      %v1171 = vunpack.c.h.b16 %v714
      %v1172 = vunpack.c.l.b16 %v715
      %v1173 = vunpack.c.h.b16 %v715
      %v1174 = vunpack.c.l.b16 %v716
      %v1175 = vunpack.c.h.b16 %v716
      %v1176 = vunpack.c.l.b16 %v717
      %v1177 = vunpack.c.h.b16 %v717
      %v1178 = vunpack.c.l.b16 %v718
      %v1179 = vunpack.c.h.b16 %v718
      %v1180 = vunpack.c.l.b16 %v719
      %v1181 = vunpack.c.h.b16 %v719
      %v1182 = vunpack.c.l.b16 %v720
      %v1183 = vunpack.c.h.b16 %v720
      %v1184 = vunpack.c.l.b16 %v721
      %v1185 = vunpack.c.h.b16 %v721
      %v1186 = vunpack.c.l.b16 %v722
      %v1187 = vunpack.c.h.b16 %v722
      %v1188 = vunpack.c.l.b16 %v723
      %v1189 = vunpack.c.h.b16 %v723
      %v1190 = vunpack.c.l.b16 %v724
      %v1191 = vunpack.c.h.b16 %v724
      %v1192 = vunpack.c.l.b16 %v725
      %v1193 = vunpack.c.h.b16 %v725
      %v1194 = vunpack.c.l.b16 %v726
      %v1195 = vunpack.c.h.b16 %v726
      %v1196 = vunpack.c.l.b16 %v727
      %v1197 = vunpack.c.h.b16 %v727
      %v1198 = vunpack.c.l.b16 %v728
      %v1199 = vunpack.c.h.b16 %v728
      %v1200 = vunpack.c.l.b16 %v729
      %v1201 = vunpack.c.h.b16 %v729
      %v1202 = vunpack.c.l.b16 %v730
      %v1203 = vunpack.c.h.b16 %v730
      %v1204 = vunpack.c.l.b16 %v731
      %v1205 = vunpack.c.h.b16 %v731
      %v1206 = vunpack.c.l.b16 %v732
      %v1207 = vunpack.c.h.b16 %v732
      %v1208 = vunpack.c.l.b16 %v733
      %v1209 = vunpack.c.h.b16 %v733
      %v1210 = vunpack.c.l.b16 %v734
      %v1211 = vunpack.c.h.b16 %v734
      %v1212 = vunpack.c.l.b16 %v735
      %v1213 = vunpack.c.h.b16 %v735
      %v1214 = vunpack.c.l.b16 %v736
      %v1215 = vunpack.c.h.b16 %v736
      %v1216 = vunpack.c.l.b16 %v737
      %v1217 = vunpack.c.h.b16 %v737
      %v1218 = vunpack.c.l.b16 %v738
      %v1219 = vunpack.c.h.b16 %v738
      %v1220 = vunpack.c.l.b16 %v739
      %v1221 = vunpack.c.h.b16 %v739
      %v1222 = vunpack.c.l.b16 %v740
      %v1223 = vunpack.c.h.b16 %v740
      %v1224 = vunpack.c.l.b16 %v741
      %v1225 = vunpack.c.h.b16 %v741
      %v1226 = vunpack.c.l.b16 %v742
      %v1227 = vunpack.c.h.b16 %v742
      %v1228 = vunpack.c.l.b16 %v743
      %v1229 = vunpack.c.h.b16 %v743
      %v1230 = vunpack.c.l.b16 %v744
      %v1231 = vunpack.c.h.b16 %v744
      %v1232 = vunpack.c.l.b16 %v745
      %v1233 = vunpack.c.h.b16 %v745
      %v1234 = vunpack.c.l.b16 %v746
      %v1235 = vunpack.c.h.b16 %v746
      %v1236 = vunpack.c.l.b16 %v747
      %v1237 = vunpack.c.h.b16 %v747
      %v1238 = vunpack.c.l.b16 %v748
      %v1239 = vunpack.c.h.b16 %v748
      %v1240 = vunpack.c.l.b16 %v749
      %v1241 = vunpack.c.h.b16 %v749
      %v1242 = vunpack.c.l.b16 %v750
      %v1243 = vunpack.c.h.b16 %v750
      %v1244 = vunpack.c.l.b16 %v751
      %v1245 = vunpack.c.h.b16 %v751
      %v1246 = vunpack.c.l.b16 %v752
      %v1247 = vunpack.c.h.b16 %v752
      %v1248 = vunpack.c.l.b16 %v753
      %v1249 = vunpack.c.h.b16 %v753
      %v1250 = vunpack.c.l.b16 %v754
      %v1251 = vunpack.c.h.b16 %v754
      %v1252 = vunpack.c.l.b16 %v755
      %v1253 = vunpack.c.h.b16 %v755
      %v1254 = vunpack.c.l.b16 %v756
      %v1255 = vunpack.c.h.b16 %v756
      %v1256 = vunpack.c.l.b16 %v757
      %v1257 = vunpack.c.h.b16 %v757
      %v1258 = vunpack.c.l.b16 %v758
      %v1259 = vunpack.c.h.b16 %v758
      %v1260 = vunpack.c.l.b16 %v759
      %v1261 = vunpack.c.h.b16 %v759
      %v1262 = vunpack.c.l.b16 %v760
      %v1263 = vunpack.c.h.b16 %v760
      %v1264 = vunpack.c.l.b16 %v761
      %v1265 = vunpack.c.h.b16 %v761
      %v1266 = vunpack.c.l.b16 %v762
      %v1267 = vunpack.c.h.b16 %v762
      %v1268 = vunpack.c.l.b16 %v763
      %v1269 = vunpack.c.h.b16 %v763
      %v1270 = vunpack.c.l.b16 %v764
      %v1271 = vunpack.c.h.b16 %v764
      %v1272 = vunpack.c.l.b16 %v765
      %v1273 = vunpack.c.h.b16 %v765
      %v1274 = vunpack.c.l.b16 %v766
      %v1275 = vunpack.c.h.b16 %v766
      %v1276 = vunpack.c.l.b16 %v767
      %v1277 = vunpack.c.h.b16 %v767
      %v1278 = vunpack.c.l.b16 %v768
      %v1279 = vunpack.c.h.b16 %v768
      %v1280 = vunpack.c.l.b16 %v769
      %v1281 = vunpack.c.h.b16 %v769
      %v1282 = vunpack.c.l.b16 %v770
      %v1283 = vunpack.c.h.b16 %v770
      %v1284 = vunpack.c.l.b16 %v771
      %v1285 = vunpack.c.h.b16 %v771
      %v1286 = vunpack.c.l.b16 %v772
      %v1287 = vunpack.c.h.b16 %v772
      %v1288 = vunpack.c.l.b16 %v773
      %v1289 = vunpack.c.h.b16 %v773
      %v1290 = vunpack.c.l.b16 %v774
      %v1291 = vunpack.c.h.b16 %v774
      %v1292 = vunpack.c.l.b16 %v775
      %v1293 = vunpack.c.h.b16 %v775
      %v1294 = vunpack.c.l.b16 %v776
      %v1295 = vunpack.c.h.b16 %v776
      %v1296 = vunpack.c.l.b16 %v777
      %v1297 = vunpack.c.h.b16 %v777
      %v1298 = vunpack.c.l.b16 %v778
      %v1299 = vunpack.c.h.b16 %v778
      %v1300 = vunpack.c.l.b16 %v779
      %v1301 = vunpack.c.h.b16 %v779
      %v1302 = vunpack.c.l.b16 %v780
      %v1303 = vunpack.c.h.b16 %v780
      %v1304 = vunpack.c.l.b16 %v781
      %v1305 = vunpack.c.h.b16 %v781
      %v1306 = vunpack.c.l.b16 %v782
      %v1307 = vunpack.c.h.b16 %v782
      %v1308 = vunpack.c.l.b16 %v783
      %v1309 = vunpack.c.h.b16 %v783
      %v1310 = vunpack.c.l.b16 %v784
      %v1311 = vunpack.c.h.b16 %v784
      %v1312 = vunpack.c.l.b16 %v785
      %v1313 = vunpack.c.h.b16 %v785
      %v1314 = vunpack.c.l.b16 %v786
      %v1315 = vunpack.c.h.b16 %v786
      %v1316 = vunpack.c.l.b16 %v787
      %v1317 = vunpack.c.h.b16 %v787
      %v1318 = vunpack.c.l.b16 %v788
      %v1319 = vunpack.c.h.b16 %v788
      %v1320 = vunpack.c.l.b16 %v789
      %v1321 = vunpack.c.h.b16 %v789
      %v1322 = vunpack.c.l.b16 %v790
      %v1323 = vunpack.c.h.b16 %v790
      %v1324 = vunpack.c.l.b16 %v791
      %v1325 = vunpack.c.h.b16 %v791
      %v1326 = vunpack.c.l.b16 %v792
      %v1327 = vunpack.c.h.b16 %v792
      %v1328 = vunpack.c.l.b16 %v793
      %v1329 = vunpack.c.h.b16 %v793
      %v1330 = vunpack.c.l.b16 %v794
      %v1331 = vunpack.c.h.b16 %v794
      %v1332 = vunpack.c.l.b16 %v795
      %v1333 = vunpack.c.h.b16 %v795
      %v1334 = vunpack.c.l.b16 %v796
      %v1335 = vunpack.c.h.b16 %v796
      %v1336 = vunpack.c.l.b16 %v797
      %v1337 = vunpack.c.h.b16 %v797
      %v1338 = vunpack.c.l.b16 %v798
      %v1339 = vunpack.c.h.b16 %v798
      %v1340 = vunpack.c.l.b16 %v799
      %v1341 = vunpack.c.h.b16 %v799
      %v1342 = vunpack.c.l.b16 %v800
      %v1343 = vunpack.c.h.b16 %v800
      %v1344 = vunpack.c.l.b16 %v801
      %v1345 = vunpack.c.h.b16 %v801
      %v1346 = vunpack.c.l.b16 %v802
      %v1347 = vunpack.c.h.b16 %v802
      %v1348 = vunpack.c.l.b16 %v803
      %v1349 = vunpack.c.h.b16 %v803
      %v1350 = vunpack.c.l.b16 %v804
      %v1351 = vunpack.c.h.b16 %v804
      %v1352 = vunpack.c.l.b16 %v805
      %v1353 = vunpack.c.h.b16 %v805
      %v1354 = vunpack.c.l.b16 %v806
      %v1355 = vunpack.c.h.b16 %v806
      %v1356 = vunpack.c.l.b16 %v807
      %v1357 = vunpack.c.h.b16 %v807
      %v1358 = vunpack.c.l.b16 %v808
      %v1359 = vunpack.c.h.b16 %v808
      %v1360 = vunpack.c.l.b16 %v809
      %v1361 = vunpack.c.h.b16 %v809
      %v1362 = vunpack.c.l.b16 %v810
      %v1363 = vunpack.c.h.b16 %v810
      %v1364 = vunpack.c.l.b16 %v811
      %v1365 = vunpack.c.h.b16 %v811
      %v1366 = vunpack.c.l.b16 %v812
      %v1367 = vunpack.c.h.b16 %v812
      %v1368 = vunpack.c.l.b16 %v813
      %v1369 = vunpack.c.h.b16 %v813
      %v1370 = vunpack.c.l.b16 %v814
      %v1371 = vunpack.c.h.b16 %v814
      %v1372 = vunpack.c.l.b16 %v815
      %v1373 = vunpack.c.h.b16 %v815
      %v1374 = vunpack.c.l.b16 %v816
      %v1375 = vunpack.c.h.b16 %v816
      %v1376 = vunpack.c.l.b16 %v817
      %v1377 = vunpack.c.h.b16 %v817
      %v1378 = vunpack.c.l.b16 %v818
      %v1379 = vunpack.c.h.b16 %v818
      %v1380 = vunpack.c.l.b16 %v819
      %v1381 = vunpack.c.h.b16 %v819
      %v1382 = vunpack.c.l.b16 %v820
      %v1383 = vunpack.c.h.b16 %v820
      %v1384 = vunpack.c.l.b16 %v821
      %v1385 = vunpack.c.h.b16 %v821
      %v1386 = vunpack.c.l.b16 %v822
      %v1387 = vunpack.c.h.b16 %v822
      %v1388 = vunpack.c.l.b16 %v823
      %v1389 = vunpack.c.h.b16 %v823
      %v1390 = vunpack.c.l.b16 %v824
      %v1391 = vunpack.c.h.b16 %v824
      %v1392 = vunpack.c.l.b16 %v825
      %v1393 = vunpack.c.h.b16 %v825
      %v1394 = vunpack.c.l.b16 %v826
      %v1395 = vunpack.c.h.b16 %v826
      %v1396 = vunpack.c.l.b16 %v827
      %v1397 = vunpack.c.h.b16 %v827
      %v1398 = vunpack.c.l.b16 %v828
      %v1399 = vunpack.c.h.b16 %v828
      %v1400 = vunpack.c.l.b16 %v829
      %v1401 = vunpack.c.h.b16 %v829
      %v1402 = vunpack.c.l.b16 %v830
      %v1403 = vunpack.c.h.b16 %v830
      %v1404 = vunpack.c.l.b16 %v831
      %v1405 = vunpack.c.h.b16 %v831
      %v1406 = vunpack.c.l.b16 %v832
      %v1407 = vunpack.c.h.b16 %v832
      %v1408 = vunpack.c.l.b16 %v833
      %v1409 = vunpack.c.h.b16 %v833
      %v1410 = vunpack.c.l.b16 %v834
      %v1411 = vunpack.c.h.b16 %v834
      %v1412 = vunpack.c.l.b16 %v835
      %v1413 = vunpack.c.h.b16 %v835
      %v1414 = vunpack.c.l.b16 %v836
      %v1415 = vunpack.c.h.b16 %v836
      %v1416 = vunpack.c.l.b16 %v837
      %v1417 = vunpack.c.h.b16 %v837
      %v1418 = vunpack.c.l.b16 %v838
      %v1419 = vunpack.c.h.b16 %v838
      %v1420 = vunpack.c.l.b16 %v839
      %v1421 = vunpack.c.h.b16 %v839
      %v1422 = vunpack.c.l.b16 %v840
      %v1423 = vunpack.c.h.b16 %v840
      %v1424 = vunpack.c.l.b16 %v841
      %v1425 = vunpack.c.h.b16 %v841
      %v1426 = vunpack.c.l.b16 %v842
      %v1427 = vunpack.c.h.b16 %v842
      %v1428 = vunpack.c.l.b16 %v843
      %v1429 = vunpack.c.h.b16 %v843
      %v1430 = vunpack.c.l.b16 %v844
      %v1431 = vunpack.c.h.b16 %v844
      %v1432 = vunpack.c.l.b16 %v845
      %v1433 = vunpack.c.h.b16 %v845
      %v1434 = vunpack.c.l.b16 %v846
      %v1435 = vunpack.c.h.b16 %v846
      %v1436 = vunpack.c.l.b16 %v847
      %v1437 = vunpack.c.h.b16 %v847
      %v1438 = vunpack.c.l.b16 %v848
      %v1439 = vunpack.c.h.b16 %v848
      %v1440 = vunpack.c.l.b16 %v849
      %v1441 = vunpack.c.h.b16 %v849
      %v1442 = vunpack.c.l.b16 %v850
      %v1443 = vunpack.c.h.b16 %v850
      %v1444 = vunpack.c.l.b16 %v851
      %v1445 = vunpack.c.h.b16 %v851
      %v1446 = vunpack.c.l.b16 %v852
      %v1447 = vunpack.c.h.b16 %v852
      %v1448 = vunpack.c.l.b16 %v853
      %v1449 = vunpack.c.h.b16 %v853
      %v1450 = vunpack.c.l.b16 %v854
      %v1451 = vunpack.c.h.b16 %v854
      %v1452 = vunpack.c.l.b16 %v855
      %v1453 = vunpack.c.h.b16 %v855
      %v1454 = vunpack.c.l.b16 %v856
      %v1455 = vunpack.c.h.b16 %v856
      %v1456 = vunpack.c.l.b16 %v857
      %v1457 = vunpack.c.h.b16 %v857
      %v1458 = vunpack.c.l.b16 %v858
      %v1459 = vunpack.c.h.b16 %v858
      %v1460 = vunpack.c.l.b16 %v859
      %v1461 = vunpack.c.h.b16 %v859
      %v1462 = vunpack.c.l.b16 %v860
      %v1463 = vunpack.c.h.b16 %v860
      %v1464 = vunpack.c.l.b16 %v861
      %v1465 = vunpack.c.h.b16 %v861
      %v1466 = vunpack.c.l.b16 %v862
      %v1467 = vunpack.c.h.b16 %v862
      %v1468 = vunpack.c.l.b16 %v863
      %v1469 = vunpack.c.h.b16 %v863
      %v1470 = vunpack.c.l.b16 %v864
      %v1471 = vunpack.c.h.b16 %v864
      %v1472 = vpack.c.b16 %v1092, %v1088
      %v1473 = vpack.c.b16 %v1093, %v1089
      %v1474 = vpack.c.b16 %v1094, %v1090
      %v1475 = vpack.c.b16 %v1095, %v1091
      %v1476 = vpack.c.b16 %v1100, %v1096
      %v1477 = vpack.c.b16 %v1101, %v1097
      %v1478 = vpack.c.b16 %v1102, %v1098
      %v1479 = vpack.c.b16 %v1103, %v1099
      %v1480 = vpack.c.b16 %v1108, %v1104
      %v1481 = vpack.c.b16 %v1109, %v1105
      %v1482 = vpack.c.b16 %v1110, %v1106
      %v1483 = vpack.c.b16 %v1111, %v1107
      %v1484 = vpack.c.b16 %v1116, %v1112
      %v1485 = vpack.c.b16 %v1117, %v1113
      %v1486 = vpack.c.b16 %v1118, %v1114
      %v1487 = vpack.c.b16 %v1119, %v1115
      %v1488 = vpack.c.b16 %v1124, %v1120
      %v1489 = vpack.c.b16 %v1125, %v1121
      %v1490 = vpack.c.b16 %v1126, %v1122
      %v1491 = vpack.c.b16 %v1127, %v1123
      %v1492 = vpack.c.b16 %v1132, %v1128
      %v1493 = vpack.c.b16 %v1133, %v1129
      %v1494 = vpack.c.b16 %v1134, %v1130
      %v1495 = vpack.c.b16 %v1135, %v1131
      %v1496 = vpack.c.b16 %v1140, %v1136
      %v1497 = vpack.c.b16 %v1141, %v1137
      %v1498 = vpack.c.b16 %v1142, %v1138
      %v1499 = vpack.c.b16 %v1143, %v1139
      %v1500 = vpack.c.b16 %v1148, %v1144
      %v1501 = vpack.c.b16 %v1149, %v1145
      %v1502 = vpack.c.b16 %v1150, %v1146
      %v1503 = vpack.c.b16 %v1151, %v1147
      %v1504 = vpack.c.b16 %v1156, %v1152
      %v1505 = vpack.c.b16 %v1157, %v1153
      %v1506 = vpack.c.b16 %v1158, %v1154
      %v1507 = vpack.c.b16 %v1159, %v1155
      %v1508 = vpack.c.b16 %v1164, %v1160
      %v1509 = vpack.c.b16 %v1165, %v1161
      %v1510 = vpack.c.b16 %v1166, %v1162
      %v1511 = vpack.c.b16 %v1167, %v1163
      %v1512 = vpack.c.b16 %v1172, %v1168
      %v1513 = vpack.c.b16 %v1173, %v1169
      %v1514 = vpack.c.b16 %v1174, %v1170
      %v1515 = vpack.c.b16 %v1175, %v1171
      %v1516 = vpack.c.b16 %v1180, %v1176
      %v1517 = vpack.c.b16 %v1181, %v1177
      %v1518 = vpack.c.b16 %v1182, %v1178
      %v1519 = vpack.c.b16 %v1183, %v1179
      %v1520 = vpack.c.b16 %v1188, %v1184
      %v1521 = vpack.c.b16 %v1189, %v1185
      %v1522 = vpack.c.b16 %v1190, %v1186
      %v1523 = vpack.c.b16 %v1191, %v1187
      %v1524 = vpack.c.b16 %v1196, %v1192
      %v1525 = vpack.c.b16 %v1197, %v1193
      %v1526 = vpack.c.b16 %v1198, %v1194
      %v1527 = vpack.c.b16 %v1199, %v1195
      %v1528 = vpack.c.b16 %v1204, %v1200
      %v1529 = vpack.c.b16 %v1205, %v1201
      %v1530 = vpack.c.b16 %v1206, %v1202
      %v1531 = vpack.c.b16 %v1207, %v1203
      %v1532 = vpack.c.b16 %v1212, %v1208
      %v1533 = vpack.c.b16 %v1213, %v1209
      %v1534 = vpack.c.b16 %v1214, %v1210
      %v1535 = vpack.c.b16 %v1215, %v1211
      %v1536 = vpack.c.b16 %v1220, %v1216
      %v1537 = vpack.c.b16 %v1221, %v1217
      %v1538 = vpack.c.b16 %v1222, %v1218
      %v1539 = vpack.c.b16 %v1223, %v1219
      %v1540 = vpack.c.b16 %v1228, %v1224
      %v1541 = vpack.c.b16 %v1229, %v1225
      %v1542 = vpack.c.b16 %v1230, %v1226
      %v1543 = vpack.c.b16 %v1231, %v1227
      %v1544 = vpack.c.b16 %v1236, %v1232
      %v1545 = vpack.c.b16 %v1237, %v1233
      %v1546 = vpack.c.b16 %v1238, %v1234
      %v1547 = vpack.c.b16 %v1239, %v1235
      %v1548 = vpack.c.b16 %v1244, %v1240
      %v1549 = vpack.c.b16 %v1245, %v1241
      %v1550 = vpack.c.b16 %v1246, %v1242
      %v1551 = vpack.c.b16 %v1247, %v1243
      %v1552 = vpack.c.b16 %v1252, %v1248
      %v1553 = vpack.c.b16 %v1253, %v1249
      %v1554 = vpack.c.b16 %v1254, %v1250
      %v1555 = vpack.c.b16 %v1255, %v1251
      %v1556 = vpack.c.b16 %v1260, %v1256
      %v1557 = vpack.c.b16 %v1261, %v1257
      %v1558 = vpack.c.b16 %v1262, %v1258
      %v1559 = vpack.c.b16 %v1263, %v1259
      %v1560 = vpack.c.b16 %v1268, %v1264
      %v1561 = vpack.c.b16 %v1269, %v1265
      %v1562 = vpack.c.b16 %v1270, %v1266
      %v1563 = vpack.c.b16 %v1271, %v1267
      %v1564 = vpack.c.b16 %v1276, %v1272
      %v1565 = vpack.c.b16 %v1277, %v1273
      %v1566 = vpack.c.b16 %v1278, %v1274
      %v1567 = vpack.c.b16 %v1279, %v1275
      %v1568 = vpack.c.b16 %v1284, %v1280
      %v1569 = vpack.c.b16 %v1285, %v1281
      %v1570 = vpack.c.b16 %v1286, %v1282
      %v1571 = vpack.c.b16 %v1287, %v1283
      %v1572 = vpack.c.b16 %v1292, %v1288
      %v1573 = vpack.c.b16 %v1293, %v1289
      %v1574 = vpack.c.b16 %v1294, %v1290
      %v1575 = vpack.c.b16 %v1295, %v1291
      %v1576 = vpack.c.b16 %v1300, %v1296
      %v1577 = vpack.c.b16 %v1301, %v1297
      %v1578 = vpack.c.b16 %v1302, %v1298
      %v1579 = vpack.c.b16 %v1303, %v1299
      %v1580 = vpack.c.b16 %v1308, %v1304
      %v1581 = vpack.c.b16 %v1309, %v1305
      %v1582 = vpack.c.b16 %v1310, %v1306
      %v1583 = vpack.c.b16 %v1311, %v1307
      %v1584 = vpack.c.b16 %v1316, %v1312
      %v1585 = vpack.c.b16 %v1317, %v1313
      %v1586 = vpack.c.b16 %v1318, %v1314
      %v1587 = vpack.c.b16 %v1319, %v1315
      %v1588 = vpack.c.b16 %v1324, %v1320
      %v1589 = vpack.c.b16 %v1325, %v1321
      %v1590 = vpack.c.b16 %v1326, %v1322
      %v1591 = vpack.c.b16 %v1327, %v1323
      %v1592 = vpack.c.b16 %v1332, %v1328
      %v1593 = vpack.c.b16 %v1333, %v1329
      %v1594 = vpack.c.b16 %v1334, %v1330
      %v1595 = vpack.c.b16 %v1335, %v1331
      %v1596 = vpack.c.b16 %v1340, %v1336
      %v1597 = vpack.c.b16 %v1341, %v1337
      %v1598 = vpack.c.b16 %v1342, %v1338
      %v1599 = vpack.c.b16 %v1343, %v1339
      %v1600 = vpack.c.b16 %v1348, %v1344
      %v1601 = vpack.c.b16 %v1349, %v1345
      %v1602 = vpack.c.b16 %v1350, %v1346
      %v1603 = vpack.c.b16 %v1351, %v1347
      %v1604 = vpack.c.b16 %v1356, %v1352
      %v1605 = vpack.c.b16 %v1357, %v1353
      %v1606 = vpack.c.b16 %v1358, %v1354
      %v1607 = vpack.c.b16 %v1359, %v1355
      %v1608 = vpack.c.b16 %v1364, %v1360
      %v1609 = vpack.c.b16 %v1365, %v1361
      %v1610 = vpack.c.b16 %v1366, %v1362
      %v1611 = vpack.c.b16 %v1367, %v1363
      %v1612 = vpack.c.b16 %v1372, %v1368
      %v1613 = vpack.c.b16 %v1373, %v1369
      %v1614 = vpack.c.b16 %v1374, %v1370
      %v1615 = vpack.c.b16 %v1375, %v1371
      %v1616 = vpack.c.b16 %v1380, %v1376
      %v1617 = vpack.c.b16 %v1381, %v1377
      %v1618 = vpack.c.b16 %v1382, %v1378
      %v1619 = vpack.c.b16 %v1383, %v1379
      %v1620 = vpack.c.b16 %v1388, %v1384
      %v1621 = vpack.c.b16 %v1389, %v1385
      %v1622 = vpack.c.b16 %v1390, %v1386
      %v1623 = vpack.c.b16 %v1391, %v1387
      %v1624 = vpack.c.b16 %v1396, %v1392
      %v1625 = vpack.c.b16 %v1397, %v1393
      %v1626 = vpack.c.b16 %v1398, %v1394
      %v1627 = vpack.c.b16 %v1399, %v1395
      %v1628 = vpack.c.b16 %v1404, %v1400
      %v1629 = vpack.c.b16 %v1405, %v1401
      %v1630 = vpack.c.b16 %v1406, %v1402
      %v1631 = vpack.c.b16 %v1407, %v1403
      %v1632 = vpack.c.b16 %v1412, %v1408
      %v1633 = vpack.c.b16 %v1413, %v1409
      %v1634 = vpack.c.b16 %v1414, %v1410
      %v1635 = vpack.c.b16 %v1415, %v1411
      %v1636 = vpack.c.b16 %v1420, %v1416
      %v1637 = vpack.c.b16 %v1421, %v1417
      %v1638 = vpack.c.b16 %v1422, %v1418
      %v1639 = vpack.c.b16 %v1423, %v1419
      %v1640 = vpack.c.b16 %v1428, %v1424
      %v1641 = vpack.c.b16 %v1429, %v1425
      %v1642 = vpack.c.b16 %v1430, %v1426
      %v1643 = vpack.c.b16 %v1431, %v1427
      %v1644 = vpack.c.b16 %v1436, %v1432
      %v1645 = vpack.c.b16 %v1437, %v1433
      %v1646 = vpack.c.b16 %v1438, %v1434
      %v1647 = vpack.c.b16 %v1439, %v1435
      %v1648 = vpack.c.b16 %v1444, %v1440
      %v1649 = vpack.c.b16 %v1445, %v1441
      %v1650 = vpack.c.b16 %v1446, %v1442
      %v1651 = vpack.c.b16 %v1447, %v1443
      %v1652 = vpack.c.b16 %v1452, %v1448
      %v1653 = vpack.c.b16 %v1453, %v1449
      %v1654 = vpack.c.b16 %v1454, %v1450
      %v1655 = vpack.c.b16 %v1455, %v1451
      %v1656 = vpack.c.b16 %v1460, %v1456
      %v1657 = vpack.c.b16 %v1461, %v1457
      %v1658 = vpack.c.b16 %v1462, %v1458
      %v1659 = vpack.c.b16 %v1463, %v1459
      %v1660 = vpack.c.b16 %v1468, %v1464
      %v1661 = vpack.c.b16 %v1469, %v1465
      %v1662 = vpack.c.b16 %v1470, %v1466
      %v1663 = vpack.c.b16 %v1471, %v1467
      %1856 = vmatpush.bf16.msra.mxu0 %v1500
      %1857 = vmatpush.bf16.msra.mxu0 %v1496
      %1858 = vmatpush.bf16.msra.mxu0 %v1492
      %1859 = vmatpush.bf16.msra.mxu0 %v1488
      %1860 = vmatpush.bf16.msra.mxu0 %v1484
      %1861 = vmatpush.bf16.msra.mxu0 %v1480
      %1862 = vmatpush.bf16.msra.mxu0 %v1476
      %1863 = vmatpush.bf16.msra.mxu0 %v1472
      %1864 = vmatmul.bf16.gmra.mxu0 %v884
      %v1865 = vpop.f32.mrf.mxu0
      %v1866 = vadd.f32 %v867, %v1865
      %v1867 = vpop.f32.mrf.mxu0
      %1868 = vdwg.mxu0
      %1869 = vmatpush.bf16.msra.mxu0 %v1532
      %1870 = vmatpush.bf16.msra.mxu0 %v1528
      %1871 = vmatpush.bf16.msra.mxu0 %v1524
      %1872 = vmatpush.bf16.msra.mxu0 %v1520
      %1873 = vmatpush.bf16.msra.mxu0 %v1516
      %1874 = vmatpush.bf16.msra.mxu0 %v1512
      %1875 = vmatpush.bf16.msra.mxu0 %v1508
      %1876 = vmatpush.bf16.msra.mxu0 %v1504
      %1877 = vmatmul.bf16.gmra.mxu0 %v885
      %v1878 = vpop.f32.mrf.mxu0
      %v1879 = vadd.f32 %v1866, %v1878
      %v1880 = vpop.f32.mrf.mxu0
      %1881 = vdwg.mxu0
      %1882 = vmatpush.bf16.msra.mxu0 %v1564
      %1883 = vmatpush.bf16.msra.mxu0 %v1560
      %1884 = vmatpush.bf16.msra.mxu0 %v1556
      %1885 = vmatpush.bf16.msra.mxu0 %v1552
      %1886 = vmatpush.bf16.msra.mxu0 %v1548
      %1887 = vmatpush.bf16.msra.mxu0 %v1544
      %1888 = vmatpush.bf16.msra.mxu0 %v1540
      %1889 = vmatpush.bf16.msra.mxu0 %v1536
      %1890 = vmatmul.bf16.gmra.mxu0 %v886
      %v1891 = vpop.f32.mrf.mxu0
      %v1892 = vadd.f32 %v1879, %v1891
      %v1893 = vpop.f32.mrf.mxu0
      %1894 = vdwg.mxu0
      %1895 = vmatpush.bf16.msra.mxu0 %v1596
      %1896 = vmatpush.bf16.msra.mxu0 %v1592
      %1897 = vmatpush.bf16.msra.mxu0 %v1588
      %1898 = vmatpush.bf16.msra.mxu0 %v1584
      %1899 = vmatpush.bf16.msra.mxu0 %v1580
      %1900 = vmatpush.bf16.msra.mxu0 %v1576
      %1901 = vmatpush.bf16.msra.mxu0 %v1572
      %1902 = vmatpush.bf16.msra.mxu0 %v1568
      %1903 = vmatmul.bf16.gmra.mxu0 %v887
      %v1904 = vpop.f32.mrf.mxu0
      %v1905 = vadd.f32 %v1892, %v1904
      %v1906 = vpop.f32.mrf.mxu0
      %1907 = vdwg.mxu0
      %1908 = vmatpush.bf16.msra.mxu0 %v1628
      %1909 = vmatpush.bf16.msra.mxu0 %v1624
      %1910 = vmatpush.bf16.msra.mxu0 %v1620
      %1911 = vmatpush.bf16.msra.mxu0 %v1616
      %1912 = vmatpush.bf16.msra.mxu0 %v1612
      %1913 = vmatpush.bf16.msra.mxu0 %v1608
      %1914 = vmatpush.bf16.msra.mxu0 %v1604
      %1915 = vmatpush.bf16.msra.mxu0 %v1600
      %1916 = vmatmul.bf16.gmra.mxu0 %v888
      %v1917 = vpop.f32.mrf.mxu0
      %v1918 = vadd.f32 %v1905, %v1917
      %v1919 = vpop.f32.mrf.mxu0
      %1920 = vdwg.mxu0
      %1921 = vmatpush.bf16.msra.mxu0 %v1660
      %1922 = vmatpush.bf16.msra.mxu0 %v1656
      %1923 = vmatpush.bf16.msra.mxu0 %v1652
      %1924 = vmatpush.bf16.msra.mxu0 %v1648
      %1925 = vmatpush.bf16.msra.mxu0 %v1644
      %1926 = vmatpush.bf16.msra.mxu0 %v1640
      %1927 = vmatpush.bf16.msra.mxu0 %v1636
      %1928 = vmatpush.bf16.msra.mxu0 %v1632
      %1929 = vmatmul.bf16.gmra.mxu0 %v889
      %v1930 = vpop.f32.mrf.mxu0
      %v1931 = vadd.f32 %v1918, %v1930
      %v1932 = vpop.f32.mrf.mxu0
      %1933 = vdwg.mxu0
      %1934 = vmatpush.bf16.msra.mxu0 %v1501
      %1935 = vmatpush.bf16.msra.mxu0 %v1497
      %1936 = vmatpush.bf16.msra.mxu0 %v1493
      %1937 = vmatpush.bf16.msra.mxu0 %v1489
      %1938 = vmatpush.bf16.msra.mxu0 %v1485
      %1939 = vmatpush.bf16.msra.mxu0 %v1481
      %1940 = vmatpush.bf16.msra.mxu0 %v1477
      %1941 = vmatpush.bf16.msra.mxu0 %v1473
      %1942 = vmatmul.bf16.gmra.mxu0 %v884
      %v1943 = vpop.f32.mrf.mxu0
      %v1944 = vadd.f32 %v868, %v1943
      %v1945 = vpop.f32.mrf.mxu0
      %1946 = vdwg.mxu0
      %1947 = vmatpush.bf16.msra.mxu0 %v1533
      %1948 = vmatpush.bf16.msra.mxu0 %v1529
      %1949 = vmatpush.bf16.msra.mxu0 %v1525
      %1950 = vmatpush.bf16.msra.mxu0 %v1521
      %1951 = vmatpush.bf16.msra.mxu0 %v1517
      %1952 = vmatpush.bf16.msra.mxu0 %v1513
      %1953 = vmatpush.bf16.msra.mxu0 %v1509
      %1954 = vmatpush.bf16.msra.mxu0 %v1505
      %1955 = vmatmul.bf16.gmra.mxu0 %v885
      %v1956 = vpop.f32.mrf.mxu0
      %v1957 = vadd.f32 %v1944, %v1956
      %v1958 = vpop.f32.mrf.mxu0
      %1959 = vdwg.mxu0
      %1960 = vmatpush.bf16.msra.mxu0 %v1565
      %1961 = vmatpush.bf16.msra.mxu0 %v1561
      %1962 = vmatpush.bf16.msra.mxu0 %v1557
      %1963 = vmatpush.bf16.msra.mxu0 %v1553
      %1964 = vmatpush.bf16.msra.mxu0 %v1549
      %1965 = vmatpush.bf16.msra.mxu0 %v1545
      %1966 = vmatpush.bf16.msra.mxu0 %v1541
      %1967 = vmatpush.bf16.msra.mxu0 %v1537
      %1968 = vmatmul.bf16.gmra.mxu0 %v886
      %v1969 = vpop.f32.mrf.mxu0
      %v1970 = vadd.f32 %v1957, %v1969
      %v1971 = vpop.f32.mrf.mxu0
      %1972 = vdwg.mxu0
      %1973 = vmatpush.bf16.msra.mxu0 %v1597
      %1974 = vmatpush.bf16.msra.mxu0 %v1593
      %1975 = vmatpush.bf16.msra.mxu0 %v1589
      %1976 = vmatpush.bf16.msra.mxu0 %v1585
      %1977 = vmatpush.bf16.msra.mxu0 %v1581
      %1978 = vmatpush.bf16.msra.mxu0 %v1577
      %1979 = vmatpush.bf16.msra.mxu0 %v1573
      %1980 = vmatpush.bf16.msra.mxu0 %v1569
      %1981 = vmatmul.bf16.gmra.mxu0 %v887
      %v1982 = vpop.f32.mrf.mxu0
      %v1983 = vadd.f32 %v1970, %v1982
      %v1984 = vpop.f32.mrf.mxu0
      %1985 = vdwg.mxu0
      %1986 = vmatpush.bf16.msra.mxu0 %v1629
      %1987 = vmatpush.bf16.msra.mxu0 %v1625
      %1988 = vmatpush.bf16.msra.mxu0 %v1621
      %1989 = vmatpush.bf16.msra.mxu0 %v1617
      %1990 = vmatpush.bf16.msra.mxu0 %v1613
      %1991 = vmatpush.bf16.msra.mxu0 %v1609
      %1992 = vmatpush.bf16.msra.mxu0 %v1605
      %1993 = vmatpush.bf16.msra.mxu0 %v1601
      %1994 = vmatmul.bf16.gmra.mxu0 %v888
      %v1995 = vpop.f32.mrf.mxu0
      %v1996 = vadd.f32 %v1983, %v1995
      %v1997 = vpop.f32.mrf.mxu0
      %1998 = vdwg.mxu0
      %1999 = vmatpush.bf16.msra.mxu0 %v1661
      %2000 = vmatpush.bf16.msra.mxu0 %v1657
      %2001 = vmatpush.bf16.msra.mxu0 %v1653
      %2002 = vmatpush.bf16.msra.mxu0 %v1649
      %2003 = vmatpush.bf16.msra.mxu0 %v1645
      %2004 = vmatpush.bf16.msra.mxu0 %v1641
      %2005 = vmatpush.bf16.msra.mxu0 %v1637
      %2006 = vmatpush.bf16.msra.mxu0 %v1633
      %2007 = vmatmul.bf16.gmra.mxu0 %v889
      %v2008 = vpop.f32.mrf.mxu0
      %v2009 = vadd.f32 %v1996, %v2008
      %v2010 = vpop.f32.mrf.mxu0
      %2011 = vdwg.mxu0
      %2012 = vmatpush.bf16.msra.mxu0 %v1502
      %2013 = vmatpush.bf16.msra.mxu0 %v1498
      %2014 = vmatpush.bf16.msra.mxu0 %v1494
      %2015 = vmatpush.bf16.msra.mxu0 %v1490
      %2016 = vmatpush.bf16.msra.mxu0 %v1486
      %2017 = vmatpush.bf16.msra.mxu0 %v1482
      %2018 = vmatpush.bf16.msra.mxu0 %v1478
      %2019 = vmatpush.bf16.msra.mxu0 %v1474
      %2020 = vmatmul.bf16.gmra.mxu0 %v884
      %v2021 = vpop.f32.mrf.mxu0
      %v2022 = vadd.f32 %v869, %v2021
      %v2023 = vpop.f32.mrf.mxu0
      %2024 = vdwg.mxu0
      %2025 = vmatpush.bf16.msra.mxu0 %v1534
      %2026 = vmatpush.bf16.msra.mxu0 %v1530
      %2027 = vmatpush.bf16.msra.mxu0 %v1526
      %2028 = vmatpush.bf16.msra.mxu0 %v1522
      %2029 = vmatpush.bf16.msra.mxu0 %v1518
      %2030 = vmatpush.bf16.msra.mxu0 %v1514
      %2031 = vmatpush.bf16.msra.mxu0 %v1510
      %2032 = vmatpush.bf16.msra.mxu0 %v1506
      %2033 = vmatmul.bf16.gmra.mxu0 %v885
      %v2034 = vpop.f32.mrf.mxu0
      %v2035 = vadd.f32 %v2022, %v2034
      %v2036 = vpop.f32.mrf.mxu0
      %2037 = vdwg.mxu0
      %2038 = vmatpush.bf16.msra.mxu0 %v1566
      %2039 = vmatpush.bf16.msra.mxu0 %v1562
      %2040 = vmatpush.bf16.msra.mxu0 %v1558
      %2041 = vmatpush.bf16.msra.mxu0 %v1554
      %2042 = vmatpush.bf16.msra.mxu0 %v1550
      %2043 = vmatpush.bf16.msra.mxu0 %v1546
      %2044 = vmatpush.bf16.msra.mxu0 %v1542
      %2045 = vmatpush.bf16.msra.mxu0 %v1538
      %2046 = vmatmul.bf16.gmra.mxu0 %v886
      %v2047 = vpop.f32.mrf.mxu0
      %v2048 = vadd.f32 %v2035, %v2047
      %v2049 = vpop.f32.mrf.mxu0
      %2050 = vdwg.mxu0
      %2051 = vmatpush.bf16.msra.mxu0 %v1598
      %2052 = vmatpush.bf16.msra.mxu0 %v1594
      %2053 = vmatpush.bf16.msra.mxu0 %v1590
      %2054 = vmatpush.bf16.msra.mxu0 %v1586
      %2055 = vmatpush.bf16.msra.mxu0 %v1582
      %2056 = vmatpush.bf16.msra.mxu0 %v1578
      %2057 = vmatpush.bf16.msra.mxu0 %v1574
      %2058 = vmatpush.bf16.msra.mxu0 %v1570
      %2059 = vmatmul.bf16.gmra.mxu0 %v887
      %v2060 = vpop.f32.mrf.mxu0
      %v2061 = vadd.f32 %v2048, %v2060
      %v2062 = vpop.f32.mrf.mxu0
      %2063 = vdwg.mxu0
      %2064 = vmatpush.bf16.msra.mxu0 %v1630
      %2065 = vmatpush.bf16.msra.mxu0 %v1626
      %2066 = vmatpush.bf16.msra.mxu0 %v1622
      %2067 = vmatpush.bf16.msra.mxu0 %v1618
      %2068 = vmatpush.bf16.msra.mxu0 %v1614
      %2069 = vmatpush.bf16.msra.mxu0 %v1610
      %2070 = vmatpush.bf16.msra.mxu0 %v1606
      %2071 = vmatpush.bf16.msra.mxu0 %v1602
      %2072 = vmatmul.bf16.gmra.mxu0 %v888
      %v2073 = vpop.f32.mrf.mxu0
      %v2074 = vadd.f32 %v2061, %v2073
      %v2075 = vpop.f32.mrf.mxu0
      %2076 = vdwg.mxu0
      %2077 = vmatpush.bf16.msra.mxu0 %v1662
      %2078 = vmatpush.bf16.msra.mxu0 %v1658
      %2079 = vmatpush.bf16.msra.mxu0 %v1654
      %2080 = vmatpush.bf16.msra.mxu0 %v1650
      %2081 = vmatpush.bf16.msra.mxu0 %v1646
      %2082 = vmatpush.bf16.msra.mxu0 %v1642
      %2083 = vmatpush.bf16.msra.mxu0 %v1638
      %2084 = vmatpush.bf16.msra.mxu0 %v1634
      %2085 = vmatmul.bf16.gmra.mxu0 %v889
      %v2086 = vpop.f32.mrf.mxu0
      %v2087 = vadd.f32 %v2074, %v2086
      %v2088 = vpop.f32.mrf.mxu0
      %2089 = vdwg.mxu0
      %2090 = vmatpush.bf16.msra.mxu0 %v1503
      %2091 = vmatpush.bf16.msra.mxu0 %v1499
      %2092 = vmatpush.bf16.msra.mxu0 %v1495
      %2093 = vmatpush.bf16.msra.mxu0 %v1491
      %2094 = vmatpush.bf16.msra.mxu0 %v1487
      %2095 = vmatpush.bf16.msra.mxu0 %v1483
      %2096 = vmatpush.bf16.msra.mxu0 %v1479
      %2097 = vmatpush.bf16.msra.mxu0 %v1475
      %2098 = vmatmul.bf16.gmra.mxu0 %v884
      %v2099 = vpop.f32.mrf.mxu0
      %v2100 = vadd.f32 %v870, %v2099
      %v2101 = vpop.f32.mrf.mxu0
      %2102 = vdwg.mxu0
      %2103 = vmatpush.bf16.msra.mxu0 %v1535
      %2104 = vmatpush.bf16.msra.mxu0 %v1531
      %2105 = vmatpush.bf16.msra.mxu0 %v1527
      %2106 = vmatpush.bf16.msra.mxu0 %v1523
      %2107 = vmatpush.bf16.msra.mxu0 %v1519
      %2108 = vmatpush.bf16.msra.mxu0 %v1515
      %2109 = vmatpush.bf16.msra.mxu0 %v1511
      %2110 = vmatpush.bf16.msra.mxu0 %v1507
      %2111 = vmatmul.bf16.gmra.mxu0 %v885
      %v2112 = vpop.f32.mrf.mxu0
      %v2113 = vadd.f32 %v2100, %v2112
      %v2114 = vpop.f32.mrf.mxu0
      %2115 = vdwg.mxu0
      %2116 = vmatpush.bf16.msra.mxu0 %v1567
      %2117 = vmatpush.bf16.msra.mxu0 %v1563
      %2118 = vmatpush.bf16.msra.mxu0 %v1559
      %2119 = vmatpush.bf16.msra.mxu0 %v1555
      %2120 = vmatpush.bf16.msra.mxu0 %v1551
      %2121 = vmatpush.bf16.msra.mxu0 %v1547
      %2122 = vmatpush.bf16.msra.mxu0 %v1543
      %2123 = vmatpush.bf16.msra.mxu0 %v1539
      %2124 = vmatmul.bf16.gmra.mxu0 %v886
      %v2125 = vpop.f32.mrf.mxu0
      %v2126 = vadd.f32 %v2113, %v2125
      %v2127 = vpop.f32.mrf.mxu0
      %2128 = vdwg.mxu0
      %2129 = vmatpush.bf16.msra.mxu0 %v1599
      %2130 = vmatpush.bf16.msra.mxu0 %v1595
      %2131 = vmatpush.bf16.msra.mxu0 %v1591
      %2132 = vmatpush.bf16.msra.mxu0 %v1587
      %2133 = vmatpush.bf16.msra.mxu0 %v1583
      %2134 = vmatpush.bf16.msra.mxu0 %v1579
      %2135 = vmatpush.bf16.msra.mxu0 %v1575
      %2136 = vmatpush.bf16.msra.mxu0 %v1571
      %2137 = vmatmul.bf16.gmra.mxu0 %v887
      %v2138 = vpop.f32.mrf.mxu0
      %v2139 = vadd.f32 %v2126, %v2138
      %v2140 = vpop.f32.mrf.mxu0
      %2141 = vdwg.mxu0
      %2142 = vmatpush.bf16.msra.mxu0 %v1631
      %2143 = vmatpush.bf16.msra.mxu0 %v1627
      %2144 = vmatpush.bf16.msra.mxu0 %v1623
      %2145 = vmatpush.bf16.msra.mxu0 %v1619
      %2146 = vmatpush.bf16.msra.mxu0 %v1615
      %2147 = vmatpush.bf16.msra.mxu0 %v1611
      %2148 = vmatpush.bf16.msra.mxu0 %v1607
      %2149 = vmatpush.bf16.msra.mxu0 %v1603
      %2150 = vmatmul.bf16.gmra.mxu0 %v888
      %v2151 = vpop.f32.mrf.mxu0
      %v2152 = vadd.f32 %v2139, %v2151
      %v2153 = vpop.f32.mrf.mxu0
      %2154 = vdwg.mxu0
      %2155 = vmatpush.bf16.msra.mxu0 %v1663
      %2156 = vmatpush.bf16.msra.mxu0 %v1659
      %2157 = vmatpush.bf16.msra.mxu0 %v1655
      %2158 = vmatpush.bf16.msra.mxu0 %v1651
      %2159 = vmatpush.bf16.msra.mxu0 %v1647
      %2160 = vmatpush.bf16.msra.mxu0 %v1643
      %2161 = vmatpush.bf16.msra.mxu0 %v1639
      %2162 = vmatpush.bf16.msra.mxu0 %v1635
      %2163 = vmatmul.bf16.gmra.mxu0 %v889
      %v2164 = vpop.f32.mrf.mxu0
      %v2165 = vadd.f32 %v2152, %v2164
      %v2166 = vpop.f32.mrf.mxu0
      %2167 = vdwg.mxu0
      %v2168 = vmax.f32 %v1931, 0.0
      %v2169 = vmax.f32 %v2009, 0.0
      %v2170 = vmax.f32 %v2087, 0.0
      %v2171 = vmax.f32 %v2165, 0.0
      %v2172 = vpack.c.bf16 %v2168, %v2168
      %v2173 = vpack.c.bf16 %v2169, %v2169
      %v2174 = vpack.c.bf16 %v2170, %v2170
      %v2175 = vpack.c.bf16 %v2171, %v2171
      %v2176 = vld [vmem:[#allocation9] sm:$0xf]
      %v2177 = vld [vmem:[#allocation9 + $0x4] sm:$0xf]
      %v2178 = vld [vmem:[#allocation9 + $0x8] sm:$0xf]
      %v2179 = vld [vmem:[#allocation9 + $0xc] sm:$0xf]
      %v2180 = vld [vmem:[#allocation9 + $0x10] sm:$0xf]
      %v2181 = vld [vmem:[#allocation9 + $0x14] sm:$0xf]
      %v2182 = vld [vmem:[#allocation9 + $0x18] sm:$0xf]
      %v2183 = vld [vmem:[#allocation9 + $0x1c] sm:$0xf]
      %v2184 = vld [vmem:[#allocation9 + $0x20] sm:$0xf]
      %v2185 = vld [vmem:[#allocation9 + $0x24] sm:$0xf]
      %v2186 = vld [vmem:[#allocation9 + $0x28] sm:$0xf]
      %v2187 = vld [vmem:[#allocation9 + $0x2c] sm:$0xf]
      %v2188 = vld [vmem:[#allocation9 + $0x30] sm:$0xf]
      %v2189 = vld [vmem:[#allocation9 + $0x34] sm:$0xf]
      %v2190 = vld [vmem:[#allocation9 + $0x38] sm:$0xf]
      %v2191 = vld [vmem:[#allocation9 + $0x3c] sm:$0xf]
      %v2192 = vld [vmem:[#allocation9 + $0x40] sm:$0xf]
      %v2193 = vld [vmem:[#allocation9 + $0x44] sm:$0xf]
      %v2194 = vld [vmem:[#allocation9 + $0x48] sm:$0xf]
      %v2195 = vld [vmem:[#allocation9 + $0x4c] sm:$0xf]
      %v2196 = vld [vmem:[#allocation9 + $0x50] sm:$0xf]
      %v2197 = vld [vmem:[#allocation9 + $0x54] sm:$0xf]
      %v2198 = vld [vmem:[#allocation9 + $0x58] sm:$0xf]
      %v2199 = vld [vmem:[#allocation9 + $0x5c] sm:$0xf]
      %v2200 = vld [vmem:[#allocation9 + $0x60] sm:$0xf]
      %v2201 = vld [vmem:[#allocation9 + $0x64] sm:$0xf]
      %v2202 = vld [vmem:[#allocation9 + $0x68] sm:$0xf]
      %v2203 = vld [vmem:[#allocation9 + $0x6c] sm:$0xf]
      %v2204 = vld [vmem:[#allocation9 + $0x70] sm:$0xf]
      %v2205 = vld [vmem:[#allocation9 + $0x74] sm:$0xf]
      %v2206 = vld [vmem:[#allocation9 + $0x78] sm:$0xf]
      %v2207 = vld [vmem:[#allocation9 + $0x7c] sm:$0xf]
      %v2208 = vld [vmem:[#allocation9 + $0x80] sm:$0xf]
      %v2209 = vld [vmem:[#allocation9 + $0x84] sm:$0xf]
      %v2210 = vld [vmem:[#allocation9 + $0x88] sm:$0xf]
      %v2211 = vld [vmem:[#allocation9 + $0x8c] sm:$0xf]
      %v2212 = vld [vmem:[#allocation9 + $0x90] sm:$0xf]
      %v2213 = vld [vmem:[#allocation9 + $0x94] sm:$0xf]
      %v2214 = vld [vmem:[#allocation9 + $0x98] sm:$0xf]
      %v2215 = vld [vmem:[#allocation9 + $0x9c] sm:$0xf]
      %v2216 = vld [vmem:[#allocation9 + $0xa0] sm:$0xf]
      %v2217 = vld [vmem:[#allocation9 + $0xa4] sm:$0xf]
      %v2218 = vld [vmem:[#allocation9 + $0xa8] sm:$0xf]
      %v2219 = vld [vmem:[#allocation9 + $0xac] sm:$0xf]
      %v2220 = vld [vmem:[#allocation9 + $0xb0] sm:$0xf]
      %v2221 = vld [vmem:[#allocation9 + $0xb4] sm:$0xf]
      %v2222 = vld [vmem:[#allocation9 + $0xb8] sm:$0xf]
      %v2223 = vld [vmem:[#allocation9 + $0xbc] sm:$0xf]
      %v2224 = vld [vmem:[#allocation9 + $0xc0] sm:$0xf]
      %v2225 = vld [vmem:[#allocation9 + $0xc4] sm:$0xf]
      %v2226 = vld [vmem:[#allocation9 + $0xc8] sm:$0xf]
      %v2227 = vld [vmem:[#allocation9 + $0xcc] sm:$0xf]
      %v2228 = vld [vmem:[#allocation9 + $0xd0] sm:$0xf]
      %v2229 = vld [vmem:[#allocation9 + $0xd4] sm:$0xf]
      %v2230 = vld [vmem:[#allocation9 + $0xd8] sm:$0xf]
      %v2231 = vld [vmem:[#allocation9 + $0xdc] sm:$0xf]
      %v2232 = vld [vmem:[#allocation9 + $0xe0] sm:$0xf]
      %v2233 = vld [vmem:[#allocation9 + $0xe4] sm:$0xf]
      %v2234 = vld [vmem:[#allocation9 + $0xe8] sm:$0xf]
      %v2235 = vld [vmem:[#allocation9 + $0xec] sm:$0xf]
      %v2236 = vld [vmem:[#allocation9 + $0xf0] sm:$0xf]
      %v2237 = vld [vmem:[#allocation9 + $0xf4] sm:$0xf]
      %v2238 = vld [vmem:[#allocation9 + $0xf8] sm:$0xf]
      %v2239 = vld [vmem:[#allocation9 + $0xfc] sm:$0xf]
      %v2240 = vld [vmem:[%s4] sm:$0x1]
      %v2242 = vperm.slane %v2240, 0
      %v2308 = vunpack.c.l.b16 %v2176
      %v2309 = vunpack.c.l.b16 %v2177
      %v2310 = vunpack.c.l.b16 %v2178
      %v2311 = vunpack.c.l.b16 %v2179
      %v2312 = vunpack.c.l.b16 %v2180
      %v2313 = vunpack.c.l.b16 %v2181
      %v2314 = vunpack.c.l.b16 %v2182
      %v2315 = vunpack.c.l.b16 %v2183
      %v2316 = vunpack.c.l.b16 %v2184
      %v2317 = vunpack.c.l.b16 %v2185
      %v2318 = vunpack.c.l.b16 %v2186
      %v2319 = vunpack.c.l.b16 %v2187
      %v2320 = vunpack.c.l.b16 %v2188
      %v2321 = vunpack.c.l.b16 %v2189
      %v2322 = vunpack.c.l.b16 %v2190
      %v2323 = vunpack.c.l.b16 %v2191
      %v2324 = vunpack.c.l.b16 %v2192
      %v2325 = vunpack.c.l.b16 %v2193
      %v2326 = vunpack.c.l.b16 %v2194
      %v2327 = vunpack.c.l.b16 %v2195
      %v2328 = vunpack.c.l.b16 %v2196
      %v2329 = vunpack.c.l.b16 %v2197
      %v2330 = vunpack.c.l.b16 %v2198
      %v2331 = vunpack.c.l.b16 %v2199
      %v2332 = vunpack.c.l.b16 %v2200
      %v2333 = vunpack.c.l.b16 %v2201
      %v2334 = vunpack.c.l.b16 %v2202
      %v2335 = vunpack.c.l.b16 %v2203
      %v2336 = vunpack.c.l.b16 %v2204
      %v2337 = vunpack.c.l.b16 %v2205
      %v2338 = vunpack.c.l.b16 %v2206
      %v2339 = vunpack.c.l.b16 %v2207
      %v2340 = vunpack.c.l.b16 %v2208
      %v2341 = vunpack.c.l.b16 %v2209
      %v2342 = vunpack.c.l.b16 %v2210
      %v2343 = vunpack.c.l.b16 %v2211
      %v2344 = vunpack.c.l.b16 %v2212
      %v2345 = vunpack.c.l.b16 %v2213
      %v2346 = vunpack.c.l.b16 %v2214
      %v2347 = vunpack.c.l.b16 %v2215
      %v2348 = vunpack.c.l.b16 %v2216
      %v2349 = vunpack.c.l.b16 %v2217
      %v2350 = vunpack.c.l.b16 %v2218
      %v2351 = vunpack.c.l.b16 %v2219
      %v2352 = vunpack.c.l.b16 %v2220
      %v2353 = vunpack.c.l.b16 %v2221
      %v2354 = vunpack.c.l.b16 %v2222
      %v2355 = vunpack.c.l.b16 %v2223
      %v2356 = vunpack.c.l.b16 %v2224
      %v2357 = vunpack.c.l.b16 %v2225
      %v2358 = vunpack.c.l.b16 %v2226
      %v2359 = vunpack.c.l.b16 %v2227
      %v2360 = vunpack.c.l.b16 %v2228
      %v2361 = vunpack.c.l.b16 %v2229
      %v2362 = vunpack.c.l.b16 %v2230
      %v2363 = vunpack.c.l.b16 %v2231
      %v2364 = vunpack.c.l.b16 %v2232
      %v2365 = vunpack.c.l.b16 %v2233
      %v2366 = vunpack.c.l.b16 %v2234
      %v2367 = vunpack.c.l.b16 %v2235
      %v2368 = vunpack.c.l.b16 %v2236
      %v2369 = vunpack.c.l.b16 %v2237
      %v2370 = vunpack.c.l.b16 %v2238
      %v2371 = vunpack.c.l.b16 %v2239
      %v2372 = vpack.c.b16 %v2309, %v2308
      %v2373 = vpack.c.b16 %v2311, %v2310
      %v2374 = vpack.c.b16 %v2313, %v2312
      %v2375 = vpack.c.b16 %v2315, %v2314
      %v2376 = vpack.c.b16 %v2317, %v2316
      %v2377 = vpack.c.b16 %v2319, %v2318
      %v2378 = vpack.c.b16 %v2321, %v2320
      %v2379 = vpack.c.b16 %v2323, %v2322
      %v2380 = vpack.c.b16 %v2325, %v2324
      %v2381 = vpack.c.b16 %v2327, %v2326
      %v2382 = vpack.c.b16 %v2329, %v2328
      %v2383 = vpack.c.b16 %v2331, %v2330
      %v2384 = vpack.c.b16 %v2333, %v2332
      %v2385 = vpack.c.b16 %v2335, %v2334
      %v2386 = vpack.c.b16 %v2337, %v2336
      %v2387 = vpack.c.b16 %v2339, %v2338
      %v2388 = vpack.c.b16 %v2341, %v2340
      %v2389 = vpack.c.b16 %v2343, %v2342
      %v2390 = vpack.c.b16 %v2345, %v2344
      %v2391 = vpack.c.b16 %v2347, %v2346
      %v2392 = vpack.c.b16 %v2349, %v2348
      %v2393 = vpack.c.b16 %v2351, %v2350
      %v2394 = vpack.c.b16 %v2353, %v2352
      %v2395 = vpack.c.b16 %v2355, %v2354
      %v2396 = vpack.c.b16 %v2357, %v2356
      %v2397 = vpack.c.b16 %v2359, %v2358
      %v2398 = vpack.c.b16 %v2361, %v2360
      %v2399 = vpack.c.b16 %v2363, %v2362
      %v2400 = vpack.c.b16 %v2365, %v2364
      %v2401 = vpack.c.b16 %v2367, %v2366
      %v2402 = vpack.c.b16 %v2369, %v2368
      %v2403 = vpack.c.b16 %v2371, %v2370
      %2436 = vmatpush.bf16.msra.mxu0 %v2379
      %2437 = vmatpush.bf16.msra.mxu0 %v2378
      %2438 = vmatpush.bf16.msra.mxu0 %v2377
      %2439 = vmatpush.bf16.msra.mxu0 %v2376
      %2440 = vmatpush.bf16.msra.mxu0 %v2375
      %2441 = vmatpush.bf16.msra.mxu0 %v2374
      %2442 = vmatpush.bf16.msra.mxu0 %v2373
      %2443 = vmatpush.bf16.msra.mxu0 %v2372
      %2444 = vmatmul.bf16.gmra.mxu0 %v2172
      %v2445 = vpop.f32.mrf.mxu0
      %v2446 = vadd.f32 %v2242, %v2445
      %v2447 = vpop.f32.mrf.mxu0
      %2448 = vdwg.mxu0
      %2449 = vmatpush.bf16.msra.mxu0 %v2387
      %2450 = vmatpush.bf16.msra.mxu0 %v2386
      %2451 = vmatpush.bf16.msra.mxu0 %v2385
      %2452 = vmatpush.bf16.msra.mxu0 %v2384
      %2453 = vmatpush.bf16.msra.mxu0 %v2383
      %2454 = vmatpush.bf16.msra.mxu0 %v2382
      %2455 = vmatpush.bf16.msra.mxu0 %v2381
      %2456 = vmatpush.bf16.msra.mxu0 %v2380
      %2457 = vmatmul.bf16.gmra.mxu0 %v2173
      %v2458 = vpop.f32.mrf.mxu0
      %v2459 = vadd.f32 %v2446, %v2458
      %v2460 = vpop.f32.mrf.mxu0
      %2461 = vdwg.mxu0
      %2462 = vmatpush.bf16.msra.mxu0 %v2395
      %2463 = vmatpush.bf16.msra.mxu0 %v2394
      %2464 = vmatpush.bf16.msra.mxu0 %v2393
      %2465 = vmatpush.bf16.msra.mxu0 %v2392
      %2466 = vmatpush.bf16.msra.mxu0 %v2391
      %2467 = vmatpush.bf16.msra.mxu0 %v2390
      %2468 = vmatpush.bf16.msra.mxu0 %v2389
      %2469 = vmatpush.bf16.msra.mxu0 %v2388
      %2470 = vmatmul.bf16.gmra.mxu0 %v2174
      %v2471 = vpop.f32.mrf.mxu0
      %v2472 = vadd.f32 %v2459, %v2471
      %v2473 = vpop.f32.mrf.mxu0
      %2474 = vdwg.mxu0
      %2475 = vmatpush.bf16.msra.mxu0 %v2403
      %2476 = vmatpush.bf16.msra.mxu0 %v2402
      %2477 = vmatpush.bf16.msra.mxu0 %v2401
      %2478 = vmatpush.bf16.msra.mxu0 %v2400
      %2479 = vmatpush.bf16.msra.mxu0 %v2399
      %2480 = vmatpush.bf16.msra.mxu0 %v2398
      %2481 = vmatpush.bf16.msra.mxu0 %v2397
      %2482 = vmatpush.bf16.msra.mxu0 %v2396
      %2483 = vmatmul.bf16.gmra.mxu0 %v2175
      %v2484 = vpop.f32.mrf.mxu0
      %v2485 = vadd.f32 %v2472, %v2484
      %v2486 = vpop.f32.mrf.mxu0
      %2487 = vdwg.mxu0
      %v2488 = vmax.f32 %v2485, 0.0
      %v2489 = vpack.c.bf16 %v2488, %v2488
      %v2490 = vld [vmem:[#allocation11] sm:$0xf]
      %v2491 = vld [vmem:[#allocation11 + $0x4] sm:$0xf]
      %v2492 = vld [vmem:[#allocation11 + $0x8] sm:$0xf]
      %v2493 = vld [vmem:[#allocation11 + $0xc] sm:$0xf]
      %v2494 = vld [vmem:[#allocation11 + $0x10] sm:$0xf]
      %v2495 = vld [vmem:[#allocation11 + $0x14] sm:$0xf]
      %v2496 = vld [vmem:[#allocation11 + $0x18] sm:$0xf]
      %v2497 = vld [vmem:[#allocation11 + $0x1c] sm:$0xf]
      %v2498 = vld [vmem:[#allocation11 + $0x20] sm:$0xf]
      %v2499 = vld [vmem:[#allocation11 + $0x24] sm:$0xf]
      %v2500 = vld [vmem:[#allocation11 + $0x28] sm:$0xf]
      %v2501 = vld [vmem:[#allocation11 + $0x2c] sm:$0xf]
      %v2502 = vld [vmem:[#allocation11 + $0x30] sm:$0xf]
      %v2503 = vld [vmem:[#allocation11 + $0x34] sm:$0xf]
      %v2504 = vld [vmem:[#allocation11 + $0x38] sm:$0xf]
      %v2505 = vld [vmem:[#allocation11 + $0x3c] sm:$0xf]
      %v2506 = vld [vmem:[%s6] sm:$0x1]
      %v2508 = vperm.slane %v2506, 0
      %v2526 = vunpack.c.l.b16 %v2490
      %v2527 = vunpack.c.l.b16 %v2491
      %v2528 = vunpack.c.l.b16 %v2492
      %v2529 = vunpack.c.l.b16 %v2493
      %v2530 = vunpack.c.l.b16 %v2494
      %v2531 = vunpack.c.l.b16 %v2495
      %v2532 = vunpack.c.l.b16 %v2496
      %v2533 = vunpack.c.l.b16 %v2497
      %v2534 = vunpack.c.l.b16 %v2498
      %v2535 = vunpack.c.l.b16 %v2499
      %v2536 = vunpack.c.l.b16 %v2500
      %v2537 = vunpack.c.l.b16 %v2501
      %v2538 = vunpack.c.l.b16 %v2502
      %v2539 = vunpack.c.l.b16 %v2503
      %v2540 = vunpack.c.l.b16 %v2504
      %v2541 = vunpack.c.l.b16 %v2505
      %v2542 = vpack.c.b16 %v2527, %v2526
      %v2543 = vpack.c.b16 %v2529, %v2528
      %v2544 = vpack.c.b16 %v2531, %v2530
      %v2545 = vpack.c.b16 %v2533, %v2532
      %v2546 = vpack.c.b16 %v2535, %v2534
      %v2547 = vpack.c.b16 %v2537, %v2536
      %v2548 = vpack.c.b16 %v2539, %v2538
      %v2549 = vpack.c.b16 %v2541, %v2540
      %2558 = vmatpush.bf16.msra.mxu0 %v2549
      %2559 = vmatpush.bf16.msra.mxu0 %v2548
      %2560 = vmatpush.bf16.msra.mxu0 %v2547
      %2561 = vmatpush.bf16.msra.mxu0 %v2546
      %2562 = vmatpush.bf16.msra.mxu0 %v2545
      %2563 = vmatpush.bf16.msra.mxu0 %v2544
      %2564 = vmatpush.bf16.msra.mxu0 %v2543
      %2565 = vmatpush.bf16.msra.mxu0 %v2542
      %2566 = vmatmul.bf16.gmra.mxu0 %v2489
      %v2567 = vpop.f32.mrf.mxu0
      %v2568 = vadd.f32 %v2508, %v2567
      %v2569 = vpop.f32.mrf.mxu0
      %2570 = vdwg.mxu0
      %v2571 = vpack.c.bf16 %v2568, %v2568
      %v2573 = vrot.slane %v2571, 3
      %vm2574 = vcmask 1040384
      %v2577 = vsel %vm2574, %v2571, %v2573
      %v2578 = vsel %vm600, %v2571, %v2573
      %v2580 = vrot.slane %v2578, 1
      %v2581 = vsel %vm602, %v2571, %v2573
      %v2583 = vrot.slane %v2581, 2
      %v2584 = vsel %vm604, %v2571, %v2573
      %v2586 = vrot.slane %v2584, 3
      %2591 = vst [vmem:[#allocation12] sm:$0x1] %v2577
      %2592 = vst [vmem:[#allocation12 + $0x1] sm:$0x1] %v2580
      %2593 = vst [vmem:[#allocation12 + $0x2] sm:$0x1] %v2583
      %2594 = vst [vmem:[#allocation12 + $0x3] sm:$0x1] %v2586
    $region57: #{tpu_custom_call.1} parent=1 // pred_fallthru
      _
    // Predicated region
    $region58: #{tpu_custom_call.1} parent=1 // pred_check
      _
    $region59: #{tpu_custom_call.1} parent=1 // pred_check_branch
      %2596 = sbr.rel (0) target = $region61
    $region60: #{tpu_custom_call.1} parent=1 // pred_region
      %2598 = vsyncadd [#allocation5], 48
      %s2599 = sshll.u32 [#allocation12], 4
      %s2600 = int_to_ptr.vmem [resolvable:$true] %s2599
      %s2601 = sshll.u32 %s7, 4
      %s2602 = int_to_ptr.hbm [resolvable:$true] %s2601
      %2607 = dma.vmem_to_hbm [thread:$0]  %s2600, 16, %s2602, [#allocation5], 16, 16, 1
    $region61: #{tpu_custom_call.1} parent=1 // pred_fallthru
      _
    // Predicated region
    $region62: #{tpu_custom_call.1} parent=1 // pred_check
      _
    $region63: #{tpu_custom_call.1} parent=1 // pred_check_branch
      %2609 = sbr.rel (0) target = $region65
    $region64: #{tpu_custom_call.1} parent=1 // pred_region
      %2611 = dma.done [#allocation5], 64
    $region65: #{tpu_custom_call.1} parent=1 // pred_fallthru
      _
    %2612 = vsyncpa [#allocation4], 1
    %2613 = vsyncpa [#allocation7], 1
    %2614 = vsyncpa [#allocation10], 1
    %2615 = vsyncpa [#allocation5], 1

</llo_original>
